<compile_context>
chip_gen: v7x
topology: tpu7x:2x2x1
jax: 0.10.0
libtpu: 0.0.40
codegen_flags: <defaults>
</compile_context>

<pallas_src>
import jax
import jax.numpy as jnp
import numpy as np
from jax import lax
from jax.experimental import pallas as pl
from jax.experimental.pallas import tpu as pltpu


# --------------------------------------------------------------------------------------
# Kernel
# --------------------------------------------------------------------------------------
def make_cnn_kernel(BB, H, W, C1, C2):
    H2, W2 = H // 2, W // 2
    H4 = H // 4
    WC1 = W * C1          # stage-1 row width, lanes ordered (j, c1)
    W2C2 = W2 * C2        # stage-2 row width, lanes ordered (j2, c2)
    f32 = jnp.float32

    def kernel(x_ref, w1_ref, b1_ref, w2_ref, b2_ref,
               fw1_ref, fb1_ref, fw2_ref, fb2_ref,
               out_ref, xpad, zbuf):
        # ---- zero only the 1-pixel halo rows (interiors are fully overwritten below).
        # Done every step (cheap: 4 tiny stores); a program_id(0)==0 guard would be wrong when
        # the "parallel" grid axis is sharded across the two v7x TensorCores.
        xpad[:, 0:1, :] = jnp.zeros((BB, 1, W), f32)
        xpad[:, H + 1:H + 2, :] = jnp.zeros((BB, 1, W), f32)
        zbuf[:, 0:1, :] = jnp.zeros((BB, 1, WC1), f32)
        zbuf[:, H2 + 1:H2 + 2, :] = jnp.zeros((BB, 1, WC1), f32)

        # ---- stage 1: conv3x3(pad=1) + bias + ReLU as ONE banded MXU matmul -------------
        xpad[:, 1:H + 1, :] = x_ref[...]                                        # (BB, H, W)
        l1 = jnp.concatenate(
            [xpad[:, dh:dh + H, :].reshape(BB * H, W) for dh in range(3)],
            axis=-1)                                                            # (BB*H, 3W)
        y1 = jnp.dot(l1, w1_ref[...], preferred_element_type=f32) + b1_ref[...]
        y1 = jnp.maximum(y1, 0.0)                                               # (BB*H, W*C1)

        # 2x2 maxpool: H via reshape+max; W via shifted-lane max.  The odd j lane-blocks of
        # the result are "don't care" (they carry max-with-neighbour garbage) and are matched
        # by all-zero rows in the banded conv2 weight, so no lane compaction is needed.
        hp1 = jnp.max(y1.reshape(BB, H2, 2, WC1), axis=2)                       # (BB, H2, W*C1)
        sh1 = jnp.concatenate([hp1[:, :, C1:], hp1[:, :, :C1]], axis=-1)        # lanes shifted by C1
        zbuf[:, 1:H2 + 1, :] = jnp.maximum(hp1, sh1)                            # one dense store

        # ---- stage 2: conv3x3(pad=1) + bias + ReLU as ONE banded MXU matmul -------------
        l2 = jnp.concatenate(
            [zbuf[:, dh:dh + H2, :].reshape(BB * H2, WC1) for dh in range(3)],
            axis=-1)                                                            # (BB*H2, 3*W*C1)
        y2 = jnp.dot(l2, w2_ref[...], preferred_element_type=f32) + b2_ref[...]
        y2 = jnp.maximum(y2, 0.0)                                               # (BB*H2, W2*C2)

        hp2 = jnp.max(y2.reshape(BB, H4, 2, W2C2), axis=2)                      # (BB, H4, W2*C2)
        sh2 = jnp.concatenate([hp2[:, :, C2:], hp2[:, :, :C2]], axis=-1)
        m2 = jnp.maximum(hp2, sh2)                                              # valid @ even j2 blocks

        # ---- flatten (lane-dense) + classifier -------------------------------------------
        feat = jnp.concatenate([m2[:, i, :] for i in range(H4)], axis=-1)       # (BB, H4*W2*C2)
        h = jnp.dot(feat, fw1_ref[...], preferred_element_type=f32) + fb1_ref[...]
        h = jnp.maximum(h, 0.0)
        # TODO(synk): nn.Dropout uses eval/inference semantics (identity); train-mode RNG not reproduced.
        out_ref[...] = jnp.dot(h, fw2_ref[...], preferred_element_type=f32) + fb2_ref[...]

    return kernel


# --------------------------------------------------------------------------------------
# Wrapper-side weight re-banding (one-time, tiny)
# --------------------------------------------------------------------------------------
def _shift_sel(n):
    """S[dw, jin, jout] = 1 iff jin == jout + dw - 1 (3-tap, pad=1, clipped at the edges)."""
    S = np.zeros((3, n, n), np.float32)
    for dw in range(3):
        for j in range(n):
            jin = j + dw - 1
            if 0 <= jin < n:
                S[dw, jin, j] = 1.0
    return S


def _pick_batch_block(B):
    """Batch rows per grid step.

    Small B -> one grid step (BB = B): forcing >= 2 steps only helps the v7x megacore and is
    pure per-step overhead on single-core v5e/v6e.  Large B -> cap BB so scratch + pipelined
    temporaries stay ~<= 8 MiB (~128 KiB/sample at 16x16/C1=8/C2=16), keep BB a multiple of 8
    when BB != B (TPU (8,128) block-shape rule for the (BB, 2) output block), and give the v7x
    megacore two parallel steps only once B >= 16.
    """
    MAX_BB = 64
    cands = [d for d in range(1, B + 1)
             if B % d == 0 and d <= MAX_BB and (d == B or d % 8 == 0)]
    if not cands:
        return B
    bb = max(cands)
    if B >= 16:
        split = [d for d in cands if B // d >= 2]
        if split:
            bb = max(split)
    return bb


def cnn_only_forward(x_nchw, params):
    B, Cin, H, W = x_nchw.shape
    assert Cin == 1, "CNNOnly expects single-channel input (Conv2d(1, ...))"
    assert H % 4 == 0 and W % 4 == 0, "H, W must be divisible by 4 (two 2x2 maxpools)"

    C1 = params["conv1_w"].shape[-1]
    C2 = params["conv2_w"].shape[-1]
    D = params["fc1_w"].shape[-1]
    H2, W2, H4, W4 = H // 2, W // 2, H // 4, W // 4
    F = H4 * W4 * C2
    assert params["fc1_w"].shape[0] == F

    f32 = jnp.float32
    x = x_nchw.reshape(B, H, W).astype(f32)          # NCHW with C==1 -> free squeeze, lane-denser DMA

    # conv1 -> banded weight:  w1band[dh*W + jin, j*C1 + c] = w1[dh, jin-j+1, 0, c] (clipped band)
    S1 = jnp.asarray(_shift_sel(W))
    w1band = jnp.einsum('djk,hdc->hjkc', S1, params["conv1_w"][:, :, 0, :].astype(f32))
    w1band = w1band.reshape(3 * W, W * C1)
    b1row = jnp.tile(params["conv1_b"].astype(f32), W).reshape(1, W * C1)

    # conv2 -> banded weight over the *uncompacted* pooled rows (valid data sits in even-j
    # lane blocks; odd blocks get all-zero weight rows, so no lane compaction in the kernel).
    S2 = jnp.asarray(_shift_sel(W2))
    t2 = jnp.einsum('djk,hdce->hjcke', S2, params["conv2_w"].astype(f32))      # (3, W2, C1, W2, C2)
    w2band = jnp.zeros((3, W2, 2, C1, W2, C2), f32).at[:, :, 0].set(t2)
    w2band = w2band.reshape(3 * W * C1, W2 * C2)
    b2row = jnp.tile(params["conv2_b"].astype(f32), W2).reshape(1, W2 * C2)

    # fc1 -> expanded weight matching the uncompacted flatten (zero rows at odd-j2 lane blocks).
    fw1 = params["fc1_w"].astype(f32).reshape(H4, W4, C2, D)
    fw1exp = jnp.zeros((H4, W4, 2, C2, D), f32).at[:, :, 0].set(fw1)
    fw1exp = fw1exp.reshape(H4 * W2 * C2, D)
    fb1 = params["fc1_b"].astype(f32).reshape(1, D)
    fw2 = params["fc2_w"].astype(f32)
    fb2 = params["fc2_b"].astype(f32).reshape(1, 2)

    BB = _pick_batch_block(B)
    G = B // BB
    WC1 = W * C1
    W2C2 = W2 * C2
    F2 = H4 * W2C2

    kernel = make_cnn_kernel(BB, H, W, C1, C2)

    out = pl.pallas_call(
        kernel,
        out_shape=jax.ShapeDtypeStruct((B, 2), f32),
        grid=(G,),
        in_specs=[
            pl.BlockSpec((BB, H, W), lambda g: (g, 0, 0)),       # x (batch-blocked)
            pl.BlockSpec((3 * W, WC1), lambda g: (0, 0)),        # conv1 banded weight
            pl.BlockSpec((1, WC1), lambda g: (0, 0)),            # conv1 bias (tiled over W)
            pl.BlockSpec((3 * WC1, W2C2), lambda g: (0, 0)),     # conv2 banded weight
            pl.BlockSpec((1, W2C2), lambda g: (0, 0)),           # conv2 bias (tiled over W2)
            pl.BlockSpec((F2, D), lambda g: (0, 0)),             # fc1 expanded weight
            pl.BlockSpec((1, D), lambda g: (0, 0)),              # fc1 bias
            pl.BlockSpec((D, 2), lambda g: (0, 0)),              # fc2 weight
            pl.BlockSpec((1, 2), lambda g: (0, 0)),              # fc2 bias
        ],
        out_specs=pl.BlockSpec((BB, 2), lambda g: (g, 0)),
        scratch_shapes=[
            pltpu.VMEM((BB, H + 2, W), f32),                     # H-haloed conv1 input
            pltpu.VMEM((BB, H2 + 2, WC1), f32),                  # H-haloed, W-pooled conv2 input
        ],
        compiler_params=pltpu.CompilerParams(
            dimension_semantics=("parallel",),
            vmem_limit_bytes=32 * 1024 * 1024,
        ),
    )(x, w1band, b1row, w2band, b2row, fw1exp, fb1, fw2, fb2)
    return out


# --------------------------------------------------------------------------------------
# Pure-JAX reference (same weight layout: NHWC convs with HWIO weights, HWC-ordered fc1 rows)
# --------------------------------------------------------------------------------------
def cnn_only_reference(x_nchw, params):
    x = jnp.transpose(x_nchw, (0, 2, 3, 1))

    def conv_block(x, w, b):
        y = lax.conv_general_dilated(x, w, (1, 1), "SAME",
                                     dimension_numbers=("NHWC", "HWIO", "NHWC"))
        y = jax.nn.relu(y + b)
        return lax.reduce_window(y, -jnp.inf, lax.max, (1, 2, 2, 1), (1, 2, 2, 1), "VALID")

    x = conv_block(x, params["conv1_w"], params["conv1_b"])
    x = conv_block(x, params["conv2_w"], params["conv2_b"])
    feat = x.reshape(x.shape[0], -1)                     # NHWC flatten == HWC-major rows
    h = jax.nn.relu(feat @ params["fc1_w"] + params["fc1_b"])
    return h @ params["fc2_w"] + params["fc2_b"]


def init_params(key, conv1_filters, conv2_filters, dense_units, H, W):
    # fc1_w rows are HWC-ordered (NHWC flatten).  A PyTorch-trained fc1 weight (CHW-ordered)
    # would need a one-time offline row permutation + transpose.
    flatten_dim = conv2_filters * (H // 4) * (W // 4)
    ks = jax.random.split(key, 8)
    return {
        "conv1_w": 0.1 * jax.random.normal(ks[0], (3, 3, 1, conv1_filters), jnp.float32),
        "conv1_b": 0.01 * jax.random.normal(ks[1], (conv1_filters,), jnp.float32),
        "conv2_w": 0.1 * jax.random.normal(ks[2], (3, 3, conv1_filters, conv2_filters), jnp.float32),
        "conv2_b": 0.01 * jax.random.normal(ks[3], (conv2_filters,), jnp.float32),
        "fc1_w": 0.05 * jax.random.normal(ks[4], (flatten_dim, dense_units), jnp.float32),
        "fc1_b": 0.01 * jax.random.normal(ks[5], (dense_units,), jnp.float32),
        "fc2_w": 0.05 * jax.random.normal(ks[6], (dense_units, 2), jnp.float32),
        "fc2_b": 0.01 * jax.random.normal(ks[7], (2,), jnp.float32),
    }


if __name__ == "__main__":
    B, H, W = 2, 16, 16
    conv1_filters, conv2_filters, dense_units, dropout = 8, 16, 32, 0.5

    root = jax.random.PRNGKey(0)
    k_x, k_p = jax.random.split(root)
    x = jax.random.normal(k_x, (B, 1, H, W), jnp.float32)   # NCHW, like the PyTorch module
    params = init_params(k_p, conv1_filters, conv2_filters, dense_units, H, W)

    forward = jax.jit(cnn_only_forward)
    out = jax.block_until_ready(forward(x, params))
    assert out.shape == (B, 2) and out.dtype == jnp.float32

    ref = cnn_only_reference(x, params)
    assert jnp.allclose(out, ref, atol=2e-3, rtol=2e-3), (out, ref)

    print("KERNEL_OK")
</pallas_src>

<mosaic_0001>
module attributes {stable_mosaic.version = 11 : i64} {
  func.func @kernel(%arg0: i32, %arg1: memref<2x16x16xf32, #tpu.memory_space<vmem>>, %arg2: memref<48x128xf32, #tpu.memory_space<vmem>>, %arg3: memref<1x128xf32, #tpu.memory_space<vmem>>, %arg4: memref<384x128xf32, #tpu.memory_space<vmem>>, %arg5: memref<1x128xf32, #tpu.memory_space<vmem>>, %arg6: memref<512x32xf32, #tpu.memory_space<vmem>>, %arg7: memref<1x32xf32, #tpu.memory_space<vmem>>, %arg8: memref<32x2xf32, #tpu.memory_space<vmem>>, %arg9: memref<1x2xf32, #tpu.memory_space<vmem>>, %arg10: memref<2x2xf32, #tpu.memory_space<vmem>>, %arg11: memref<2x18x16xf32, #tpu.memory_space<vmem>>, %arg12: memref<2x10x128xf32, #tpu.memory_space<vmem>>) attributes {dimension_semantics = [#tpu.dimension_semantics<parallel>], iteration_bounds = array<i64: 1>, scalar_prefetch = 0 : i64, scratch_operands = 2 : i64, tpu.core_type = #tpu.core_type<tc>, window_params = [{transform_indices = @transform_0, window_bounds = array<i64: 2, 16, 16>}, {pipeline_mode = #tpu.pipeline_mode<synchronous>, transform_indices = @transform_1, window_bounds = array<i64: 48, 128>}, {pipeline_mode = #tpu.pipeline_mode<synchronous>, transform_indices = @transform_2, window_bounds = array<i64: 1, 128>}, {pipeline_mode = #tpu.pipeline_mode<synchronous>, transform_indices = @transform_3, window_bounds = array<i64: 384, 128>}, {pipeline_mode = #tpu.pipeline_mode<synchronous>, transform_indices = @transform_4, window_bounds = array<i64: 1, 128>}, {pipeline_mode = #tpu.pipeline_mode<synchronous>, transform_indices = @transform_5, window_bounds = array<i64: 512, 32>}, {pipeline_mode = #tpu.pipeline_mode<synchronous>, transform_indices = @transform_6, window_bounds = array<i64: 1, 32>}, {pipeline_mode = #tpu.pipeline_mode<synchronous>, transform_indices = @transform_7, window_bounds = array<i64: 32, 2>}, {pipeline_mode = #tpu.pipeline_mode<synchronous>, transform_indices = @transform_8, window_bounds = array<i64: 1, 2>}, {transform_indices = @transform_9, window_bounds = array<i64: 2, 2>}]} {
    %cst = arith.constant 0.000000e+00 : f32
    %0 = vector.broadcast %cst : f32 to vector<2x1x16xf32>
    %c0 = arith.constant 0 : index
    %c0_0 = arith.constant 0 : index
    %c0_1 = arith.constant 0 : index
    %1 = vector.load %arg11[%c0, %c0_0, %c0_1] : memref<2x18x16xf32, #tpu.memory_space<vmem>>, vector<2x1x16xf32>
    tpu.vector_store %arg11[%c0, %c0_0, %c0_1], %0 {strides = array<i32>} : memref<2x18x16xf32, #tpu.memory_space<vmem>>, vector<2x1x16xf32>,
    %cst_2 = arith.constant 0.000000e+00 : f32
    %2 = vector.broadcast %cst_2 : f32 to vector<2x1x16xf32>
    %c0_3 = arith.constant 0 : index
    %c17 = arith.constant 17 : index
    %c0_4 = arith.constant 0 : index
    %3 = vector.load %arg11[%c0_3, %c17, %c0_4] : memref<2x18x16xf32, #tpu.memory_space<vmem>>, vector<2x1x16xf32>
    tpu.vector_store %arg11[%c0_3, %c17, %c0_4], %2 {strides = array<i32>} : memref<2x18x16xf32, #tpu.memory_space<vmem>>, vector<2x1x16xf32>,
    %cst_5 = arith.constant 0.000000e+00 : f32
    %4 = vector.broadcast %cst_5 : f32 to vector<2x1x128xf32>
    %c0_6 = arith.constant 0 : index
    %c0_7 = arith.constant 0 : index
    %c0_8 = arith.constant 0 : index
    %5 = vector.load %arg12[%c0_6, %c0_7, %c0_8] : memref<2x10x128xf32, #tpu.memory_space<vmem>>, vector<2x1x128xf32>
    tpu.vector_store %arg12[%c0_6, %c0_7, %c0_8], %4 {strides = array<i32>} : memref<2x10x128xf32, #tpu.memory_space<vmem>>, vector<2x1x128xf32>,
    %cst_9 = arith.constant 0.000000e+00 : f32
    %6 = vector.broadcast %cst_9 : f32 to vector<2x1x128xf32>
    %c0_10 = arith.constant 0 : index
    %c9 = arith.constant 9 : index
    %c0_11 = arith.constant 0 : index
    %7 = vector.load %arg12[%c0_10, %c9, %c0_11] : memref<2x10x128xf32, #tpu.memory_space<vmem>>, vector<2x1x128xf32>
    tpu.vector_store %arg12[%c0_10, %c9, %c0_11], %6 {strides = array<i32>} : memref<2x10x128xf32, #tpu.memory_space<vmem>>, vector<2x1x128xf32>,
    %c0_12 = arith.constant 0 : index
    %c0_13 = arith.constant 0 : index
    %c0_14 = arith.constant 0 : index
    %8 = vector.load %arg1[%c0_12, %c0_13, %c0_14] : memref<2x16x16xf32, #tpu.memory_space<vmem>>, vector<2x16x16xf32>
    %c0_15 = arith.constant 0 : index
    %c1 = arith.constant 1 : index
    %c0_16 = arith.constant 0 : index
    %9 = vector.load %arg11[%c0_15, %c1, %c0_16] : memref<2x18x16xf32, #tpu.memory_space<vmem>>, vector<2x16x16xf32>
    tpu.vector_store %arg11[%c0_15, %c1, %c0_16], %8 {strides = array<i32>} : memref<2x18x16xf32, #tpu.memory_space<vmem>>, vector<2x16x16xf32>,
    %c0_17 = arith.constant 0 : index
    %c0_18 = arith.constant 0 : index
    %c0_19 = arith.constant 0 : index
    %10 = vector.load %arg11[%c0_17, %c0_18, %c0_19] : memref<2x18x16xf32, #tpu.memory_space<vmem>>, vector<2x16x16xf32>
    %11 = vector.shape_cast %10 : vector<2x16x16xf32> to vector<32x16xf32>
    %c0_20 = arith.constant 0 : index
    %c1_21 = arith.constant 1 : index
    %c0_22 = arith.constant 0 : index
    %12 = vector.load %arg11[%c0_20, %c1_21, %c0_22] : memref<2x18x16xf32, #tpu.memory_space<vmem>>, vector<2x16x16xf32>
    %13 = vector.shape_cast %12 : vector<2x16x16xf32> to vector<32x16xf32>
    %c0_23 = arith.constant 0 : index
    %c2 = arith.constant 2 : index
    %c0_24 = arith.constant 0 : index
    %14 = vector.load %arg11[%c0_23, %c2, %c0_24] : memref<2x18x16xf32, #tpu.memory_space<vmem>>, vector<2x16x16xf32>
    %15 = vector.shape_cast %14 : vector<2x16x16xf32> to vector<32x16xf32>
    %16 = tpu.concatenate %11, %13, %15 in 1 : vector<32x16xf32>, vector<32x16xf32>, vector<32x16xf32> -> vector<32x48xf32>
    %c0_25 = arith.constant 0 : index
    %c0_26 = arith.constant 0 : index
    %17 = vector.load %arg2[%c0_25, %c0_26] : memref<48x128xf32, #tpu.memory_space<vmem>>, vector<48x128xf32>
    %cst_27 = arith.constant dense<0.000000e+00> : vector<32x128xf32>
    %18 = tpu.matmul %16, %17, %cst_27 {dimension_numbers = #tpu.dot_dimension_numbers<[1], [0], [0], [1], [0, 0, 1, 1], [], []>} : vector<32x48xf32>, vector<48x128xf32>, vector<32x128xf32> -> vector<32x128xf32>
    %c0_28 = arith.constant 0 : index
    %c0_29 = arith.constant 0 : index
    %19 = vector.load %arg3[%c0_28, %c0_29] : memref<1x128xf32, #tpu.memory_space<vmem>>, vector<1x128xf32>
    %20 = vector.broadcast %19 : vector<1x128xf32> to vector<32x128xf32>
    %21 = arith.addf %18, %20 : vector<32x128xf32>
    %cst_30 = arith.constant 0.000000e+00 : f32
    %22 = vector.broadcast %cst_30 : f32 to vector<32x128xf32>
    %23 = arith.maximumf %21, %22 : vector<32x128xf32>
    %24 = vector.shape_cast %23 : vector<32x128xf32> to vector<2x8x2x128xf32>
    %cst_31 = arith.constant dense<0xFF800000> : vector<2x8x128xf32>
    %25 = vector.multi_reduction <maximumf>, %24, %cst_31 [2] : vector<2x8x2x128xf32> to vector<2x8x128xf32>
    %26 = vector.extract_strided_slice %25 {offsets = [0, 0, 8], sizes = [2, 8, 120], strides = [1, 1, 1]} : vector<2x8x128xf32> to vector<2x8x120xf32>
    %27 = vector.extract_strided_slice %25 {offsets = [0, 0, 0], sizes = [2, 8, 8], strides = [1, 1, 1]} : vector<2x8x128xf32> to vector<2x8x8xf32>
    %28 = tpu.concatenate %26, %27 in 2 : vector<2x8x120xf32>, vector<2x8x8xf32> -> vector<2x8x128xf32>
    %29 = arith.maximumf %25, %28 : vector<2x8x128xf32>
    %c0_32 = arith.constant 0 : index
    %c1_33 = arith.constant 1 : index
    %c0_34 = arith.constant 0 : index
    %30 = vector.load %arg12[%c0_32, %c1_33, %c0_34] : memref<2x10x128xf32, #tpu.memory_space<vmem>>, vector<2x8x128xf32>
    tpu.vector_store %arg12[%c0_32, %c1_33, %c0_34], %29 {strides = array<i32>} : memref<2x10x128xf32, #tpu.memory_space<vmem>>, vector<2x8x128xf32>,
    %c0_35 = arith.constant 0 : index
    %c0_36 = arith.constant 0 : index
    %c0_37 = arith.constant 0 : index
    %31 = vector.load %arg12[%c0_35, %c0_36, %c0_37] : memref<2x10x128xf32, #tpu.memory_space<vmem>>, vector<2x8x128xf32>
    %32 = vector.shape_cast %31 : vector<2x8x128xf32> to vector<16x128xf32>
    %c0_38 = arith.constant 0 : index
    %c1_39 = arith.constant 1 : index
    %c0_40 = arith.constant 0 : index
    %33 = vector.load %arg12[%c0_38, %c1_39, %c0_40] : memref<2x10x128xf32, #tpu.memory_space<vmem>>, vector<2x8x128xf32>
    %34 = vector.shape_cast %33 : vector<2x8x128xf32> to vector<16x128xf32>
    %c0_41 = arith.constant 0 : index
    %c2_42 = arith.constant 2 : index
    %c0_43 = arith.constant 0 : index
    %35 = vector.load %arg12[%c0_41, %c2_42, %c0_43] : memref<2x10x128xf32, #tpu.memory_space<vmem>>, vector<2x8x128xf32>
    %36 = vector.shape_cast %35 : vector<2x8x128xf32> to vector<16x128xf32>
    %37 = tpu.concatenate %32, %34, %36 in 1 : vector<16x128xf32>, vector<16x128xf32>, vector<16x128xf32> -> vector<16x384xf32>
    %c0_44 = arith.constant 0 : index
    %c0_45 = arith.constant 0 : index
    %38 = vector.load %arg4[%c0_44, %c0_45] : memref<384x128xf32, #tpu.memory_space<vmem>>, vector<384x128xf32>
    %cst_46 = arith.constant dense<0.000000e+00> : vector<16x128xf32>
    %39 = tpu.matmul %37, %38, %cst_46 {dimension_numbers = #tpu.dot_dimension_numbers<[1], [0], [0], [1], [0, 0, 1, 1], [], []>} : vector<16x384xf32>, vector<384x128xf32>, vector<16x128xf32> -> vector<16x128xf32>
    %c0_47 = arith.constant 0 : index
    %c0_48 = arith.constant 0 : index
    %40 = vector.load %arg5[%c0_47, %c0_48] : memref<1x128xf32, #tpu.memory_space<vmem>>, vector<1x128xf32>
    %41 = vector.broadcast %40 : vector<1x128xf32> to vector<16x128xf32>
    %42 = arith.addf %39, %41 : vector<16x128xf32>
    %cst_49 = arith.constant 0.000000e+00 : f32
    %43 = vector.broadcast %cst_49 : f32 to vector<16x128xf32>
    %44 = arith.maximumf %42, %43 : vector<16x128xf32>
    %45 = vector.shape_cast %44 : vector<16x128xf32> to vector<2x4x2x128xf32>
    %cst_50 = arith.constant dense<0xFF800000> : vector<2x4x128xf32>
    %46 = vector.multi_reduction <maximumf>, %45, %cst_50 [2] : vector<2x4x2x128xf32> to vector<2x4x128xf32>
    %47 = vector.extract_strided_slice %46 {offsets = [0, 0, 16], sizes = [2, 4, 112], strides = [1, 1, 1]} : vector<2x4x128xf32> to vector<2x4x112xf32>
    %48 = vector.extract_strided_slice %46 {offsets = [0, 0, 0], sizes = [2, 4, 16], strides = [1, 1, 1]} : vector<2x4x128xf32> to vector<2x4x16xf32>
    %49 = tpu.concatenate %47, %48 in 2 : vector<2x4x112xf32>, vector<2x4x16xf32> -> vector<2x4x128xf32>
    %50 = arith.maximumf %46, %49 : vector<2x4x128xf32>
    %51 = vector.extract_strided_slice %50 {offsets = [0, 0, 0], sizes = [2, 1, 128], strides = [1, 1, 1]} : vector<2x4x128xf32> to vector<2x1x128xf32>
    %52 = vector.shape_cast %51 : vector<2x1x128xf32> to vector<2x128xf32>
    %53 = vector.extract_strided_slice %50 {offsets = [0, 1, 0], sizes = [2, 1, 128], strides = [1, 1, 1]} : vector<2x4x128xf32> to vector<2x1x128xf32>
    %54 = vector.shape_cast %53 : vector<2x1x128xf32> to vector<2x128xf32>
    %55 = vector.extract_strided_slice %50 {offsets = [0, 2, 0], sizes = [2, 1, 128], strides = [1, 1, 1]} : vector<2x4x128xf32> to vector<2x1x128xf32>
    %56 = vector.shape_cast %55 : vector<2x1x128xf32> to vector<2x128xf32>
    %57 = vector.extract_strided_slice %50 {offsets = [0, 3, 0], sizes = [2, 1, 128], strides = [1, 1, 1]} : vector<2x4x128xf32> to vector<2x1x128xf32>
    %58 = vector.shape_cast %57 : vector<2x1x128xf32> to vector<2x128xf32>
    %59 = tpu.concatenate %52, %54, %56, %58 in 1 : vector<2x128xf32>, vector<2x128xf32>, vector<2x128xf32>, vector<2x128xf32> -> vector<2x512xf32>
    %c0_51 = arith.constant 0 : index
    %c0_52 = arith.constant 0 : index
    %60 = vector.load %arg6[%c0_51, %c0_52] : memref<512x32xf32, #tpu.memory_space<vmem>>, vector<512x32xf32>
    %cst_53 = arith.constant dense<0.000000e+00> : vector<2x32xf32>
    %61 = tpu.matmul %59, %60, %cst_53 {dimension_numbers = #tpu.dot_dimension_numbers<[1], [0], [0], [1], [0, 0, 1, 1], [], []>} : vector<2x512xf32>, vector<512x32xf32>, vector<2x32xf32> -> vector<2x32xf32>
    %c0_54 = arith.constant 0 : index
    %c0_55 = arith.constant 0 : index
    %62 = vector.load %arg7[%c0_54, %c0_55] : memref<1x32xf32, #tpu.memory_space<vmem>>, vector<1x32xf32>
    %63 = vector.broadcast %62 : vector<1x32xf32> to vector<2x32xf32>
    %64 = arith.addf %61, %63 : vector<2x32xf32>
    %cst_56 = arith.constant 0.000000e+00 : f32
    %65 = vector.broadcast %cst_56 : f32 to vector<2x32xf32>
    %66 = arith.maximumf %64, %65 : vector<2x32xf32>
    %c0_57 = arith.constant 0 : index
    %c0_58 = arith.constant 0 : index
    %67 = vector.load %arg8[%c0_57, %c0_58] : memref<32x2xf32, #tpu.memory_space<vmem>>, vector<32x2xf32>
    %cst_59 = arith.constant dense<0.000000e+00> : vector<2x2xf32>
    %68 = tpu.matmul %66, %67, %cst_59 {dimension_numbers = #tpu.dot_dimension_numbers<[1], [0], [0], [1], [0, 0, 1, 1], [], []>} : vector<2x32xf32>, vector<32x2xf32>, vector<2x2xf32> -> vector<2x2xf32>
    %c0_60 = arith.constant 0 : index
    %c0_61 = arith.constant 0 : index
    %69 = vector.load %arg9[%c0_60, %c0_61] : memref<1x2xf32, #tpu.memory_space<vmem>>, vector<1x2xf32>
    %70 = vector.broadcast %69 : vector<1x2xf32> to vector<2x2xf32>
    %71 = arith.addf %68, %70 : vector<2x2xf32>
    %c0_62 = arith.constant 0 : index
    %c0_63 = arith.constant 0 : index
    %72 = vector.load %arg10[%c0_62, %c0_63] : memref<2x2xf32, #tpu.memory_space<vmem>>, vector<2x2xf32>
    tpu.vector_store %arg10[%c0_62, %c0_63], %71 {strides = array<i32>} : memref<2x2xf32, #tpu.memory_space<vmem>>, vector<2x2xf32>,
    return
  }
  func.func @transform_0(%arg0: i32) -> (i32, i32, i32) {
    %c0_i32 = arith.constant 0 : i32
    %c0_i32_0 = arith.constant 0 : i32
    %c0_i32_1 = arith.constant 0 : i32
    return %arg0, %c0_i32, %c0_i32_0 : i32, i32, i32
  }
  func.func @transform_1(%arg0: i32) -> (i32, i32) {
    %c0_i32 = arith.constant 0 : i32
    %c0_i32_0 = arith.constant 0 : i32
    %c0_i32_1 = arith.constant 0 : i32
    return %c0_i32, %c0_i32_0 : i32, i32
  }
  func.func @transform_2(%arg0: i32) -> (i32, i32) {
    %c0_i32 = arith.constant 0 : i32
    %c0_i32_0 = arith.constant 0 : i32
    %c0_i32_1 = arith.constant 0 : i32
    return %c0_i32, %c0_i32_0 : i32, i32
  }
  func.func @transform_3(%arg0: i32) -> (i32, i32) {
    %c0_i32 = arith.constant 0 : i32
    %c0_i32_0 = arith.constant 0 : i32
    %c0_i32_1 = arith.constant 0 : i32
    return %c0_i32, %c0_i32_0 : i32, i32
  }
  func.func @transform_4(%arg0: i32) -> (i32, i32) {
    %c0_i32 = arith.constant 0 : i32
    %c0_i32_0 = arith.constant 0 : i32
    %c0_i32_1 = arith.constant 0 : i32
    return %c0_i32, %c0_i32_0 : i32, i32
  }
  func.func @transform_5(%arg0: i32) -> (i32, i32) {
    %c0_i32 = arith.constant 0 : i32
    %c0_i32_0 = arith.constant 0 : i32
    %c0_i32_1 = arith.constant 0 : i32
    return %c0_i32, %c0_i32_0 : i32, i32
  }
  func.func @transform_6(%arg0: i32) -> (i32, i32) {
    %c0_i32 = arith.constant 0 : i32
    %c0_i32_0 = arith.constant 0 : i32
    %c0_i32_1 = arith.constant 0 : i32
    return %c0_i32, %c0_i32_0 : i32, i32
  }
  func.func @transform_7(%arg0: i32) -> (i32, i32) {
    %c0_i32 = arith.constant 0 : i32
    %c0_i32_0 = arith.constant 0 : i32
    %c0_i32_1 = arith.constant 0 : i32
    return %c0_i32, %c0_i32_0 : i32, i32
  }
  func.func @transform_8(%arg0: i32) -> (i32, i32) {
    %c0_i32 = arith.constant 0 : i32
    %c0_i32_0 = arith.constant 0 : i32
    %c0_i32_1 = arith.constant 0 : i32
    return %c0_i32, %c0_i32_0 : i32, i32
  }
  func.func @transform_9(%arg0: i32) -> (i32, i32) {
    %c0_i32 = arith.constant 0 : i32
    %c0_i32_0 = arith.constant 0 : i32
    return %arg0, %c0_i32 : i32, i32
  }
}

</mosaic_0001>

<llo_original>
// kernel: tile.14
$region0: #{tile.14}
  %s0 = inlined_call_operand.vmem [shape: f32[16,8], index: 0, kind: input, shape index: {}]
  %s1 = inlined_call_operand.vmem [shape: f32[1,128], index: 1, kind: output, shape index: {}]
  $region1: #{tile.14} parent=0
    #allocation0 [shape = 'u8[4096]{0}', space=vmem, size = 0x1000, scoped, tag = 'scoped mem for output reshape']
    %v2 = vld [vmem:[%s0] sm:$0x1]
    %vm3 = vcmask 64512
    %4 = vst.msk [vmem:[#allocation0] sm:$0x1] %vm3, %v2
    %s5 = scalar_lea.vmem %s0, 15
    %v6 = vld [vmem:[%s5] sm:$0x1]
    %7 = vrot.lane.b32.xlu0 %v6, 120
    %v8 = vpop.permute.xlu0 %7
    %vm9 = vcmask 1048512
    %10 = vst.msk [vmem:[#allocation0] sm:$0x1] %vm9, %v8
    %s11 = scalar_lea.vmem %s0, 14
    %v12 = vld [vmem:[%s11] sm:$0x1]
    %13 = vrot.lane.b32.xlu0 %v12, 112
    %v14 = vpop.permute.xlu0 %13
    %vm15 = vcmask 982912
    %16 = vst.msk [vmem:[#allocation0] sm:$0x1] %vm15, %v14
    %s17 = scalar_lea.vmem %s0, 13
    %v18 = vld [vmem:[%s17] sm:$0x1]
    %19 = vrot.lane.b32.xlu0 %v18, 104
    %v20 = vpop.permute.xlu0 %19
    %vm21 = vcmask 917312
    %22 = vst.msk [vmem:[#allocation0] sm:$0x1] %vm21, %v20
    %s23 = scalar_lea.vmem %s0, 12
    %v24 = vld [vmem:[%s23] sm:$0x1]
    %25 = vrot.lane.b32.xlu0 %v24, 96
    %v26 = vpop.permute.xlu0 %25
    %vm27 = vcmask 851712
    %28 = vst.msk [vmem:[#allocation0] sm:$0x1] %vm27, %v26
    %s29 = scalar_lea.vmem %s0, 11
    %v30 = vld [vmem:[%s29] sm:$0x1]
    %31 = vrot.lane.b32.xlu0 %v30, 88
    %v32 = vpop.permute.xlu0 %31
    %vm33 = vcmask 786112
    %34 = vst.msk [vmem:[#allocation0] sm:$0x1] %vm33, %v32
    %s35 = scalar_lea.vmem %s0, 10
    %v36 = vld [vmem:[%s35] sm:$0x1]
    %37 = vrot.lane.b32.xlu0 %v36, 80
    %v38 = vpop.permute.xlu0 %37
    %vm39 = vcmask 720512
    %40 = vst.msk [vmem:[#allocation0] sm:$0x1] %vm39, %v38
    %s41 = scalar_lea.vmem %s0, 9
    %v42 = vld [vmem:[%s41] sm:$0x1]
    %43 = vrot.lane.b32.xlu0 %v42, 72
    %v44 = vpop.permute.xlu0 %43
    %vm45 = vcmask 654912
    %46 = vst.msk [vmem:[#allocation0] sm:$0x1] %vm45, %v44
    %s47 = scalar_lea.vmem %s0, 8
    %v48 = vld [vmem:[%s47] sm:$0x1]
    %49 = vrot.lane.b32.xlu0 %v48, 64
    %v50 = vpop.permute.xlu0 %49
    %vm51 = vcmask 589312
    %52 = vst.msk [vmem:[#allocation0] sm:$0x1] %vm51, %v50
    %s53 = scalar_lea.vmem %s0, 7
    %v54 = vld [vmem:[%s53] sm:$0x1]
    %55 = vrot.lane.b32.xlu0 %v54, 56
    %v56 = vpop.permute.xlu0 %55
    %vm57 = vcmask 523712
    %58 = vst.msk [vmem:[#allocation0] sm:$0x1] %vm57, %v56
    %s59 = scalar_lea.vmem %s0, 6
    %v60 = vld [vmem:[%s59] sm:$0x1]
    %61 = vrot.lane.b32.xlu0 %v60, 48
    %v62 = vpop.permute.xlu0 %61
    %vm63 = vcmask 458112
    %64 = vst.msk [vmem:[#allocation0] sm:$0x1] %vm63, %v62
    %s65 = scalar_lea.vmem %s0, 5
    %v66 = vld [vmem:[%s65] sm:$0x1]
    %67 = vrot.lane.b32.xlu0 %v66, 40
    %v68 = vpop.permute.xlu0 %67
    %vm69 = vcmask 392512
    %70 = vst.msk [vmem:[#allocation0] sm:$0x1] %vm69, %v68
    %s71 = scalar_lea.vmem %s0, 4
    %v72 = vld [vmem:[%s71] sm:$0x1]
    %73 = vrot.lane.b32.xlu0 %v72, 32
    %v74 = vpop.permute.xlu0 %73
    %vm75 = vcmask 326912
    %76 = vst.msk [vmem:[#allocation0] sm:$0x1] %vm75, %v74
    %s77 = scalar_lea.vmem %s0, 3
    %v78 = vld [vmem:[%s77] sm:$0x1]
    %79 = vrot.lane.b32.xlu0 %v78, 24
    %v80 = vpop.permute.xlu0 %79
    %vm81 = vcmask 261312
    %82 = vst.msk [vmem:[#allocation0] sm:$0x1] %vm81, %v80
    %s83 = scalar_lea.vmem %s0, 2
    %v84 = vld [vmem:[%s83] sm:$0x1]
    %85 = vrot.lane.b32.xlu0 %v84, 16
    %v86 = vpop.permute.xlu0 %85
    %vm87 = vcmask 195712
    %88 = vst.msk [vmem:[#allocation0] sm:$0x1] %vm87, %v86
    %s89 = scalar_lea.vmem %s0, 1
    %v90 = vld [vmem:[%s89] sm:$0x1]
    %91 = vrot.lane.b32.xlu0 %v90, 8
    %v92 = vpop.permute.xlu0 %91
    %vm93 = vcmask 130112
    %94 = vst.msk [vmem:[#allocation0] sm:$0x1] %vm93, %v92
    %s96 = sshllo.u32 0, 1
    %v98 = vld [vmem:[#allocation0] sm:%s96]
    %s99 = sshllo.u32 0, 1
    %100 = vst [vmem:[%s1] sm:%s99] %v98

// kernel: tile.13
$region0: #{tile.13}
  #allocation0 [shape = 's32[1]{0}', space=sflag, size = 0x4, scoped, tag = 'scoped memory for tile.13']
  %s0 = inlined_call_operand.vmem [shape: f32[8], index: 0, kind: input, shape index: {}]
  %s1 = inlined_call_operand.vmem [shape: f32[16,8], index: 1, kind: output, shape index: {}]
  // Predicated region
  $region2: #{tile.13} parent=0 // pred_check
    _
  $region3: #{tile.13} parent=0 // pred_check_branch
    %3 = sbr.rel (0) target = $region5
  $region4: #{tile.13} parent=0 // pred_region
    _
  $region5: #{tile.13} parent=0 // pred_fallthru
    _
  %v4 = vld [vmem:[%s0] ss:$0 sm:$0xff]
  %5 = vst [vmem:[%s1] sm:$0xff] %v4
  %s6 = scalar_lea.vmem %s1, 8
  %7 = vst [vmem:[%s6] sm:$0xff] %v4

// kernel: tile.18
$region0: #{tile.18}
  #allocation0 [shape = 's32[1]{0}', space=sflag, size = 0x4, scoped, tag = 'scoped memory for tile.18']
  %s0 = inlined_call_operand.vmem [shape: f32[16], index: 0, kind: input, shape index: {}]
  %s1 = inlined_call_operand.vmem [shape: f32[8,16], index: 1, kind: output, shape index: {}]
  // Predicated region
  $region2: #{tile.18} parent=0 // pred_check
    _
  $region3: #{tile.18} parent=0 // pred_check_branch
    %3 = sbr.rel (0) target = $region5
  $region4: #{tile.18} parent=0 // pred_region
    _
  $region5: #{tile.18} parent=0 // pred_fallthru
    _
  %v4 = vld [vmem:[%s0] ss:$0 sm:$0xff]
  %5 = vst [vmem:[%s1] sm:$0xff] %v4

// kernel: tile.19
$region0: #{tile.19}
  %s0 = inlined_call_operand.vmem [shape: f32[8,16], index: 0, kind: input, shape index: {}]
  %s1 = inlined_call_operand.vmem [shape: f32[1,128], index: 1, kind: output, shape index: {}]
  $region1: #{tile.19} parent=0
    #allocation0 [shape = 'u8[4096]{0}', space=vmem, size = 0x1000, scoped, tag = 'scoped mem for output reshape']
    %v2 = vld [vmem:[%s0] sm:$0x1]
    %vm3 = vcmask 130048
    %4 = vst.msk [vmem:[#allocation0] sm:$0x1] %vm3, %v2
    %s5 = scalar_lea.vmem %s0, 7
    %v6 = vld [vmem:[%s5] sm:$0x1]
    %7 = vrot.lane.b32.xlu0 %v6, 112
    %v8 = vpop.permute.xlu0 %7
    %vm9 = vcmask 1048448
    %10 = vst.msk [vmem:[#allocation0] sm:$0x1] %vm9, %v8
    %s11 = scalar_lea.vmem %s0, 6
    %v12 = vld [vmem:[%s11] sm:$0x1]
    %13 = vrot.lane.b32.xlu0 %v12, 96
    %v14 = vpop.permute.xlu0 %13
    %vm15 = vcmask 917248
    %16 = vst.msk [vmem:[#allocation0] sm:$0x1] %vm15, %v14
    %s17 = scalar_lea.vmem %s0, 5
    %v18 = vld [vmem:[%s17] sm:$0x1]
    %19 = vrot.lane.b32.xlu0 %v18, 80
    %v20 = vpop.permute.xlu0 %19
    %vm21 = vcmask 786048
    %22 = vst.msk [vmem:[#allocation0] sm:$0x1] %vm21, %v20
    %s23 = scalar_lea.vmem %s0, 4
    %v24 = vld [vmem:[%s23] sm:$0x1]
    %25 = vrot.lane.b32.xlu0 %v24, 64
    %v26 = vpop.permute.xlu0 %25
    %vm27 = vcmask 654848
    %28 = vst.msk [vmem:[#allocation0] sm:$0x1] %vm27, %v26
    %s29 = scalar_lea.vmem %s0, 3
    %v30 = vld [vmem:[%s29] sm:$0x1]
    %31 = vrot.lane.b32.xlu0 %v30, 48
    %v32 = vpop.permute.xlu0 %31
    %vm33 = vcmask 523648
    %34 = vst.msk [vmem:[#allocation0] sm:$0x1] %vm33, %v32
    %s35 = scalar_lea.vmem %s0, 2
    %v36 = vld [vmem:[%s35] sm:$0x1]
    %37 = vrot.lane.b32.xlu0 %v36, 32
    %v38 = vpop.permute.xlu0 %37
    %vm39 = vcmask 392448
    %40 = vst.msk [vmem:[#allocation0] sm:$0x1] %vm39, %v38
    %s41 = scalar_lea.vmem %s0, 1
    %v42 = vld [vmem:[%s41] sm:$0x1]
    %43 = vrot.lane.b32.xlu0 %v42, 16
    %v44 = vpop.permute.xlu0 %43
    %vm45 = vcmask 261248
    %46 = vst.msk [vmem:[#allocation0] sm:$0x1] %vm45, %v44
    %s48 = sshllo.u32 0, 1
    %v50 = vld [vmem:[#allocation0] sm:%s48]
    %s51 = sshllo.u32 0, 1
    %52 = vst [vmem:[%s1] sm:%s51] %v50

// kernel: cnn_only_forward.1
$region0: #{cnn_only_forward.1}
  #allocation0 [shape = 'u32[]', space=smem, size = 0x4, offset = 0x4, fixed_abs, tag = 'smem constant byte address 0x4 - core index']
  #allocation1 [shape = 'u32[144,128]{1,0:T(1,128)}', space=vmem, size = 0x12000, scoped, tag = 'internal scratch']
  #allocation2 [shape = 'f32[2,18,16]{2,1,0:T(8,128)}', space=vmem, size = 0x6000, scoped, tag = 'scratch operand']
  #allocation3 [shape = 'f32[2,10,128]{2,1,0:T(8,128)}', space=vmem, size = 0x4000, scoped, tag = 'scratch operand']
  %s0 = inlined_call_operand.vmem [shape: f32[2,16,16], index: 0, kind: input, shape index: {}]
  %s1 = inlined_call_operand.vmem [shape: f32[48,128], index: 1, kind: input, shape index: {}]
  %s2 = inlined_call_operand.vmem [shape: f32[1,128], index: 2, kind: input, shape index: {}]
  %s3 = inlined_call_operand.vmem [shape: f32[384,128], index: 3, kind: input, shape index: {}]
  %s4 = inlined_call_operand.vmem [shape: f32[1,128], index: 4, kind: input, shape index: {}]
  %s5 = inlined_call_operand.vmem [shape: f32[512,32], index: 5, kind: input, shape index: {}]
  %s6 = inlined_call_operand.vmem [shape: f32[1,32], index: 6, kind: input, shape index: {}]
  %s7 = inlined_call_operand.vmem [shape: f32[32,2], index: 7, kind: input, shape index: {}]
  %s8 = inlined_call_operand.vmem [shape: f32[1,2], index: 8, kind: input, shape index: {}]
  %s9 = inlined_call_operand.hbm [shape: f32[2,2], index: 9, kind: output, shape index: {}]
  %s10 = sld [smem:[#allocation0]]
  $region46: #{cnn_only_forward.1} parent=0
    _
  %s12 = ssub.s32 1, %s10
  %s13 = scalar_select 0, %s12, %s10
  $region1: #{cnn_only_forward.1} parent=0
    #allocation4 [shape = 'u8[1024]{0}', space=vmem, size = 0x400, scoped, tag = 'output window, operand 0, single buffered']
    #allocation5 [shape = 's32[1]{0}', space=sflag, size = 0x4, scoped, tag = 'scoped memory for cnn_only_forward.1']
    %14 = vsyncpa [#allocation5], 0
    // Predicated region
    $region2: #{cnn_only_forward.1} parent=1 // pred_check
      _
    $region3: #{cnn_only_forward.1} parent=1 // pred_check_branch
      %16 = sbr.rel (0) target = $region5
    $region4: #{cnn_only_forward.1} parent=1 // pred_region
      _
    $region5: #{cnn_only_forward.1} parent=1 // pred_fallthru
      _
    // Predicated region
    $region6: #{cnn_only_forward.1} parent=1 // pred_check
      _
    $region7: #{cnn_only_forward.1} parent=1 // pred_check_branch
      %18 = sbr.rel (0) target = $region9
    $region8: #{cnn_only_forward.1} parent=1 // pred_region
      _
    $region9: #{cnn_only_forward.1} parent=1 // pred_fallthru
      _
    // Predicated region
    $region10: #{cnn_only_forward.1} parent=1 // pred_check
      _
    $region11: #{cnn_only_forward.1} parent=1 // pred_check_branch
      %20 = sbr.rel (0) target = $region13
    $region12: #{cnn_only_forward.1} parent=1 // pred_region
      _
    $region13: #{cnn_only_forward.1} parent=1 // pred_fallthru
      _
    // Predicated region
    $region14: #{cnn_only_forward.1} parent=1 // pred_check
      _
    $region15: #{cnn_only_forward.1} parent=1 // pred_check_branch
      %22 = sbr.rel (0) target = $region17
    $region16: #{cnn_only_forward.1} parent=1 // pred_region
      _
    $region17: #{cnn_only_forward.1} parent=1 // pred_fallthru
      _
    // Predicated region
    $region18: #{cnn_only_forward.1} parent=1 // pred_check
      _
    $region19: #{cnn_only_forward.1} parent=1 // pred_check_branch
      %24 = sbr.rel (0) target = $region21
    $region20: #{cnn_only_forward.1} parent=1 // pred_region
      _
    $region21: #{cnn_only_forward.1} parent=1 // pred_fallthru
      _
    // Predicated region
    $region22: #{cnn_only_forward.1} parent=1 // pred_check
      _
    $region23: #{cnn_only_forward.1} parent=1 // pred_check_branch
      %26 = sbr.rel (0) target = $region25
    $region24: #{cnn_only_forward.1} parent=1 // pred_region
      _
    $region25: #{cnn_only_forward.1} parent=1 // pred_fallthru
      _
    // Predicated region
    $region26: #{cnn_only_forward.1} parent=1 // pred_check
      _
    $region27: #{cnn_only_forward.1} parent=1 // pred_check_branch
      %28 = sbr.rel (0) target = $region29
    $region28: #{cnn_only_forward.1} parent=1 // pred_region
      _
    $region29: #{cnn_only_forward.1} parent=1 // pred_fallthru
      _
    // Predicated region
    $region30: #{cnn_only_forward.1} parent=1 // pred_check
      _
    $region31: #{cnn_only_forward.1} parent=1 // pred_check_branch
      %30 = sbr.rel (0) target = $region33
    $region32: #{cnn_only_forward.1} parent=1 // pred_region
      _
    $region33: #{cnn_only_forward.1} parent=1 // pred_fallthru
      _
    // Predicated region
    $region34: #{cnn_only_forward.1} parent=1 // pred_check
      _
    $region35: #{cnn_only_forward.1} parent=1 // pred_check_branch
      %32 = sbr.rel (0) target = $region37
    $region36: #{cnn_only_forward.1} parent=1 // pred_region
      _
    $region37: #{cnn_only_forward.1} parent=1 // pred_fallthru
      _
    %vm33 = vcmask 122880
    %34 = vst.msk [vmem:[#allocation2] sm:$0x1] %vm33, 0.0
    %35 = vst.msk [vmem:[#allocation2 + $0x18] sm:$0x1] %vm33, 0.0
    %36 = vst.msk [vmem:[#allocation2 + $0x11] sm:$0x1] %vm33, 0.0
    %37 = vst.msk [vmem:[#allocation2 + $0x29] sm:$0x1] %vm33, 0.0
    %38 = vst [vmem:[#allocation3] sm:$0x1] 0.0
    %39 = vst [vmem:[#allocation3 + $0x10] sm:$0x1] 0.0
    %40 = vst [vmem:[#allocation3 + $0x9] sm:$0x1] 0.0
    %41 = vst [vmem:[#allocation3 + $0x19] sm:$0x1] 0.0
    %v42 = vld [vmem:[%s0] sm:$0xff]
    %v43 = vld [vmem:[%s0 + $0x8] sm:$0xff]
    %v44 = vld [vmem:[%s0 + $0x10] sm:$0xff]
    %v45 = vld [vmem:[%s0 + $0x18] sm:$0xff]
    %vm46 = vcmask 130048
    %47 = vst.msk [vmem:[#allocation2 + $0x1] sm:$0xff] %vm46, %v42
    %48 = vst.msk [vmem:[#allocation2 + $0x9] sm:$0xff] %vm46, %v43
    %49 = vst.msk [vmem:[#allocation2 + $0x19] sm:$0xff] %vm46, %v44
    %50 = vst.msk [vmem:[#allocation2 + $0x21] sm:$0xff] %vm46, %v45
    %v51 = vld [vmem:[#allocation2] sm:$0xff]
    %v52 = vld [vmem:[#allocation2 + $0x8] sm:$0xff]
    %v53 = vld [vmem:[#allocation2 + $0x18] sm:$0xff]
    %v54 = vld [vmem:[#allocation2 + $0x20] sm:$0xff]
    %v55 = vld [vmem:[#allocation2 + $0x1] sm:$0xff]
    %v56 = vld [vmem:[#allocation2 + $0x9] sm:$0xff]
    %v57 = vld [vmem:[#allocation2 + $0x19] sm:$0xff]
    %v58 = vld [vmem:[#allocation2 + $0x21] sm:$0xff]
    %v59 = vld [vmem:[#allocation2 + $0x2] sm:$0xff]
    %v60 = vld [vmem:[#allocation2 + $0xa] sm:$0xff]
    %v61 = vld [vmem:[#allocation2 + $0x1a] sm:$0xff]
    %v62 = vld [vmem:[#allocation2 + $0x22] sm:$0xff]
    %67 = vrot.lane.b32.xlu0 %v55, 16
    %v68 = vpop.permute.xlu0 %67
    %69 = vrot.lane.b32.xlu0 %v56, 16
    %v70 = vpop.permute.xlu0 %69
    %71 = vrot.lane.b32.xlu0 %v57, 16
    %v72 = vpop.permute.xlu0 %71
    %73 = vrot.lane.b32.xlu0 %v58, 16
    %v74 = vpop.permute.xlu0 %73
    %83 = vrot.lane.b32.xlu0 %v59, 32
    %v84 = vpop.permute.xlu0 %83
    %85 = vrot.lane.b32.xlu0 %v60, 32
    %v86 = vpop.permute.xlu0 %85
    %87 = vrot.lane.b32.xlu0 %v61, 32
    %v88 = vpop.permute.xlu0 %87
    %89 = vrot.lane.b32.xlu0 %v62, 32
    %v90 = vpop.permute.xlu0 %89
    %v95 = vsel %vm46, %v51, %v68
    %v96 = vsel %vm46, %v52, %v70
    %v97 = vsel %vm46, %v53, %v72
    %v98 = vsel %vm46, %v54, %v74
    %vm99 = vcmask 261120
    %v100 = vsel %vm99, %v95, %v84
    %v101 = vsel %vm99, %v96, %v86
    %v102 = vsel %vm99, %v97, %v88
    %v103 = vsel %vm99, %v98, %v90
    %v104 = vld [vmem:[%s1] sm:$0xff]
    %v105 = vld [vmem:[%s1 + $0x8] sm:$0xff]
    %v106 = vld [vmem:[%s1 + $0x10] sm:$0xff]
    %v107 = vld [vmem:[%s1 + $0x18] sm:$0xff]
    %v108 = vld [vmem:[%s1 + $0x20] sm:$0xff]
    %v109 = vld [vmem:[%s1 + $0x28] sm:$0xff]
    %v110 = vld [vmem:[%s2] sm:$0x1]
    %v112 = vlaneseq
    %v113 = vshrl.u32 %v112, 7
    %v114 = vsub.s32 0, %v113
    %v115 = vrot.slane %v110, %v114
    %vm117 = vcmask 392192
    %v119 = vsel %vm117, %v100, 0
    %v122 = vsel %vm117, %v101, 0
    %v125 = vsel %vm117, %v102, 0
    %v128 = vsel %vm117, %v103, 0
    %130 = vmatprep.subr.mxu0 0.0
    %131 = vmatpush1.msra.mxu0 %v104
    %132 = vmatprep.subr.mxu0 0.0
    %133 = vmatpush1.msra.mxu0 %v105
    %134 = vmatprep.subr.mxu0 0.0
    %135 = vmatpush1.msra.mxu0 %v106
    %136 = vmatprep.subr.mxu0 0.0
    %137 = vmatpush1.msra.mxu0 %v107
    %138 = vmatprep.subr.mxu0 0.0
    %139 = vmatpush1.msra.mxu0 %v108
    %140 = vmatprep.subr.mxu0 0.0
    %141 = vmatpush1.msra.mxu0 %v109
    %142 = vmatprep.subr.mxu0 0.0
    %143 = vmatpush1.msra.mxu0 0.0
    %144 = vmatprep.subr.mxu0 0.0
    %145 = vmatpush1.msra.mxu0 0.0
    %146 = vmatprep.subr.mxu0 0.0
    %147 = vmatpush1.msra.mxu0 0.0
    %148 = vmatprep.subr.mxu0 0.0
    %149 = vmatpush1.msra.mxu0 0.0
    %150 = vmatprep.subr.mxu0 0.0
    %151 = vmatpush1.msra.mxu0 0.0
    %152 = vmatprep.subr.mxu0 0.0
    %153 = vmatpush1.msra.mxu0 0.0
    %154 = vmatprep.subr.mxu0 0.0
    %155 = vmatpush1.msra.mxu0 0.0
    %156 = vmatprep.subr.mxu0 0.0
    %157 = vmatpush1.msra.mxu0 0.0
    %158 = vmatprep.subr.mxu0 0.0
    %159 = vmatpush1.msra.mxu0 0.0
    %160 = vmatprep.subr.mxu0 0.0
    %161 = vmatpush1.msra.mxu0 0.0
    %162 = vmatprep.subr.mxu0 0.0
    %163 = vmatpush1.msra.mxu0 0.0
    %164 = vmatprep.subr.mxu0 0.0
    %165 = vmatpush1.msra.mxu0 0.0
    %166 = vmatprep.subr.mxu0 0.0
    %167 = vmatpush1.msra.mxu0 0.0
    %168 = vmatprep.subr.mxu0 0.0
    %169 = vmatpush1.msra.mxu0 0.0
    %170 = vmatprep.subr.mxu0 0.0
    %171 = vmatpush1.msra.mxu0 0.0
    %172 = vmatprep.subr.mxu0 0.0
    %173 = vmatpush1.msra.mxu0 0.0
    %174 = vmatprep.subr.mxu0 0.0
    %175 = vmatpush1.msra.mxu0 0.0
    %176 = vmatprep.subr.mxu0 0.0
    %177 = vmatpush1.msra.mxu0 0.0
    %178 = vmatprep.subr.mxu0 0.0
    %179 = vmatpush1.msra.mxu0 0.0
    %180 = vmatprep.subr.mxu0 0.0
    %181 = vmatpush1.msra.mxu0 0.0
    %182 = vmatprep.subr.mxu0 0.0
    %183 = vmatpush1.msra.mxu0 0.0
    %184 = vmatprep.subr.mxu0 0.0
    %185 = vmatpush1.msra.mxu0 0.0
    %186 = vmatprep.subr.mxu0 0.0
    %187 = vmatpush1.msra.mxu0 0.0
    %188 = vmatprep.subr.mxu0 0.0
    %189 = vmatpush1.msra.mxu0 0.0
    %190 = vmatprep.subr.mxu0 0.0
    %191 = vmatpush1.msra.mxu0 0.0
    %192 = vmatprep.subr.mxu0 0.0
    %193 = vmatpush1.msra.mxu0 0.0
    %194 = vmatprep.mubr.f32.mxu0 0.0
    %195 = vmatmul.mubr.f32.gmra.mrb[0].mxu0 %v119
    %v196 = vpop.f32.mrb[0].mxu0
    %v197 = vadd.f32 %v115, %v196
    %v198 = vpop.f32.mrb[0].mxu0
    %199 = vmatprep.mubr.f32.mxu0 0.0
    %200 = vmatmul.mubr.f32.gmra.mrb[0].mxu0 %v122
    %v201 = vpop.f32.mrb[0].mxu0
    %v202 = vadd.f32 %v115, %v201
    %v203 = vpop.f32.mrb[0].mxu0
    %204 = vmatprep.mubr.f32.mxu0 0.0
    %205 = vmatmul.mubr.f32.gmra.mrb[0].mxu0 %v125
    %v206 = vpop.f32.mrb[0].mxu0
    %v207 = vadd.f32 %v115, %v206
    %v208 = vpop.f32.mrb[0].mxu0
    %209 = vmatprep.mubr.f32.mxu0 0.0
    %210 = vmatmul.mubr.f32.gmra.mrb[0].mxu0 %v128
    %v211 = vpop.f32.mrb[0].mxu0
    %v212 = vadd.f32 %v115, %v211
    %v213 = vpop.f32.mrb[0].mxu0
    %214 = vdwg.mxu0
    %v215 = vmax.f32 %v197, 0.0
    %v216 = vmax.f32 %v202, 0.0
    %v217 = vmax.f32 %v207, 0.0
    %v218 = vmax.f32 %v212, 0.0
    %v223 = vcombine.high %v215, %v215
    %v225 = vunpack.c.l.s4 1983009808
    %v226 = vunpack.c.0.s8 %v225
    %v227 = vlaneseq
    %v228 = vshrl.u32 %v227, 7
    %v229 = vsub.s32 %v226, %v228
    %v230 = vrot.slane %v215, %v229
    %v232 = vunpack.c.l.s4 1983009808
    %v233 = vunpack.c.0.s8 %v232
    %v234 = vlaneseq
    %v235 = vshrl.u32 %v234, 7
    %v236 = vsub.s32 %v233, %v235
    %v237 = vrot.slane %v223, %v236
    %v238 = vcombine.high %v230, %v230
    %v239 = vcombine.high %v237, %v237
    %v240 = vcombine.high %v216, %v216
    %v242 = vunpack.c.l.s4 1983009808
    %v243 = vunpack.c.0.s8 %v242
    %v244 = vlaneseq
    %v245 = vshrl.u32 %v244, 7
    %v246 = vsub.s32 %v243, %v245
    %v247 = vrot.slane %v216, %v246
    %v249 = vunpack.c.l.s4 1983009808
    %v250 = vunpack.c.0.s8 %v249
    %v251 = vlaneseq
    %v252 = vshrl.u32 %v251, 7
    %v253 = vsub.s32 %v250, %v252
    %v254 = vrot.slane %v240, %v253
    %v255 = vcombine.high %v247, %v247
    %v256 = vcombine.high %v254, %v254
    %v257 = vcombine.high %v217, %v217
    %v259 = vunpack.c.l.s4 1983009808
    %v260 = vunpack.c.0.s8 %v259
    %v261 = vlaneseq
    %v262 = vshrl.u32 %v261, 7
    %v263 = vsub.s32 %v260, %v262
    %v264 = vrot.slane %v217, %v263
    %v266 = vunpack.c.l.s4 1983009808
    %v267 = vunpack.c.0.s8 %v266
    %v268 = vlaneseq
    %v269 = vshrl.u32 %v268, 7
    %v270 = vsub.s32 %v267, %v269
    %v271 = vrot.slane %v257, %v270
    %v272 = vcombine.high %v264, %v264
    %v273 = vcombine.high %v271, %v271
    %v274 = vcombine.high %v218, %v218
    %v276 = vunpack.c.l.s4 1983009808
    %v277 = vunpack.c.0.s8 %v276
    %v278 = vlaneseq
    %v279 = vshrl.u32 %v278, 7
    %v280 = vsub.s32 %v277, %v279
    %v281 = vrot.slane %v218, %v280
    %v283 = vunpack.c.l.s4 1983009808
    %v284 = vunpack.c.0.s8 %v283
    %v285 = vlaneseq
    %v286 = vshrl.u32 %v285, 7
    %v287 = vsub.s32 %v284, %v286
    %v288 = vrot.slane %v274, %v287
    %v289 = vcombine.high %v281, %v281
    %v290 = vcombine.high %v288, %v288
    %vm307 = vcmask 1041408
    %v308 = vsel %vm307, %v230, -inf
    %v309 = vrot.slane %v308, 4
    %v310 = vmax.f32 %v308, %v309
    %v311 = vrot.slane %v310, 2
    %v312 = vmax.f32 %v310, %v311
    %v313 = vrot.slane %v312, 1
    %v314 = vmax.f32 %v312, %v313
    %v315 = vsel %vm307, %v238, -inf
    %v316 = vrot.slane %v315, 4
    %v317 = vmax.f32 %v315, %v316
    %v318 = vrot.slane %v317, 2
    %v319 = vmax.f32 %v317, %v318
    %v320 = vrot.slane %v319, 1
    %v321 = vmax.f32 %v319, %v320
    %v322 = vsel %vm307, %v237, -inf
    %v323 = vrot.slane %v322, 4
    %v324 = vmax.f32 %v322, %v323
    %v325 = vrot.slane %v324, 2
    %v326 = vmax.f32 %v324, %v325
    %v327 = vrot.slane %v326, 1
    %v328 = vmax.f32 %v326, %v327
    %v329 = vsel %vm307, %v239, -inf
    %v330 = vrot.slane %v329, 4
    %v331 = vmax.f32 %v329, %v330
    %v332 = vrot.slane %v331, 2
    %v333 = vmax.f32 %v331, %v332
    %v334 = vrot.slane %v333, 1
    %v335 = vmax.f32 %v333, %v334
    %v336 = vsel %vm307, %v247, -inf
    %v337 = vrot.slane %v336, 4
    %v338 = vmax.f32 %v336, %v337
    %v339 = vrot.slane %v338, 2
    %v340 = vmax.f32 %v338, %v339
    %v341 = vrot.slane %v340, 1
    %v342 = vmax.f32 %v340, %v341
    %v343 = vsel %vm307, %v255, -inf
    %v344 = vrot.slane %v343, 4
    %v345 = vmax.f32 %v343, %v344
    %v346 = vrot.slane %v345, 2
    %v347 = vmax.f32 %v345, %v346
    %v348 = vrot.slane %v347, 1
    %v349 = vmax.f32 %v347, %v348
    %v350 = vsel %vm307, %v254, -inf
    %v351 = vrot.slane %v350, 4
    %v352 = vmax.f32 %v350, %v351
    %v353 = vrot.slane %v352, 2
    %v354 = vmax.f32 %v352, %v353
    %v355 = vrot.slane %v354, 1
    %v356 = vmax.f32 %v354, %v355
    %v357 = vsel %vm307, %v256, -inf
    %v358 = vrot.slane %v357, 4
    %v359 = vmax.f32 %v357, %v358
    %v360 = vrot.slane %v359, 2
    %v361 = vmax.f32 %v359, %v360
    %v362 = vrot.slane %v361, 1
    %v363 = vmax.f32 %v361, %v362
    %v364 = vsel %vm307, %v264, -inf
    %v365 = vrot.slane %v364, 4
    %v366 = vmax.f32 %v364, %v365
    %v367 = vrot.slane %v366, 2
    %v368 = vmax.f32 %v366, %v367
    %v369 = vrot.slane %v368, 1
    %v370 = vmax.f32 %v368, %v369
    %v371 = vsel %vm307, %v272, -inf
    %v372 = vrot.slane %v371, 4
    %v373 = vmax.f32 %v371, %v372
    %v374 = vrot.slane %v373, 2
    %v375 = vmax.f32 %v373, %v374
    %v376 = vrot.slane %v375, 1
    %v377 = vmax.f32 %v375, %v376
    %v378 = vsel %vm307, %v271, -inf
    %v379 = vrot.slane %v378, 4
    %v380 = vmax.f32 %v378, %v379
    %v381 = vrot.slane %v380, 2
    %v382 = vmax.f32 %v380, %v381
    %v383 = vrot.slane %v382, 1
    %v384 = vmax.f32 %v382, %v383
    %v385 = vsel %vm307, %v273, -inf
    %v386 = vrot.slane %v385, 4
    %v387 = vmax.f32 %v385, %v386
    %v388 = vrot.slane %v387, 2
    %v389 = vmax.f32 %v387, %v388
    %v390 = vrot.slane %v389, 1
    %v391 = vmax.f32 %v389, %v390
    %v392 = vsel %vm307, %v281, -inf
    %v393 = vrot.slane %v392, 4
    %v394 = vmax.f32 %v392, %v393
    %v395 = vrot.slane %v394, 2
    %v396 = vmax.f32 %v394, %v395
    %v397 = vrot.slane %v396, 1
    %v398 = vmax.f32 %v396, %v397
    %v399 = vsel %vm307, %v289, -inf
    %v400 = vrot.slane %v399, 4
    %v401 = vmax.f32 %v399, %v400
    %v402 = vrot.slane %v401, 2
    %v403 = vmax.f32 %v401, %v402
    %v404 = vrot.slane %v403, 1
    %v405 = vmax.f32 %v403, %v404
    %v406 = vsel %vm307, %v288, -inf
    %v407 = vrot.slane %v406, 4
    %v408 = vmax.f32 %v406, %v407
    %v409 = vrot.slane %v408, 2
    %v410 = vmax.f32 %v408, %v409
    %v411 = vrot.slane %v410, 1
    %v412 = vmax.f32 %v410, %v411
    %v413 = vsel %vm307, %v290, -inf
    %v414 = vrot.slane %v413, 4
    %v415 = vmax.f32 %v413, %v414
    %v416 = vrot.slane %v415, 2
    %v417 = vmax.f32 %v415, %v416
    %v418 = vrot.slane %v417, 1
    %v419 = vmax.f32 %v417, %v418
    %vm436 = vcmask 1041409
    %v437 = vsel %vm436, %v321, %v314
    %vm438 = vcmask 1042434
    %v439 = vsel %vm438, %v328, %v437
    %vm440 = vcmask 1043459
    %v441 = vsel %vm440, %v335, %v439
    %vm442 = vcmask 1044484
    %v443 = vsel %vm442, %v342, %v441
    %vm444 = vcmask 1045509
    %v445 = vsel %vm444, %v349, %v443
    %vm446 = vcmask 1046534
    %v447 = vsel %vm446, %v356, %v445
    %vm448 = vcmask 1047559
    %v449 = vsel %vm448, %v363, %v447
    %v450 = vsel %vm436, %v377, %v370
    %v451 = vsel %vm438, %v384, %v450
    %v452 = vsel %vm440, %v391, %v451
    %v453 = vsel %vm442, %v398, %v452
    %v454 = vsel %vm444, %v405, %v453
    %v455 = vsel %vm446, %v412, %v454
    %v456 = vsel %vm448, %v419, %v455
    %457 = vrot.lane.b32.xlu0 %v449, 120
    %v458 = vpop.permute.xlu0 %457
    %459 = vrot.lane.b32.xlu0 %v456, 120
    %v460 = vpop.permute.xlu0 %459
    %v465 = vrot.slane %v458, 1
    %v466 = vrot.slane %v458, 2
    %v467 = vrot.slane %v458, 3
    %v468 = vrot.slane %v458, 4
    %v469 = vrot.slane %v458, 5
    %v470 = vrot.slane %v458, 6
    %v471 = vrot.slane %v458, 7
    %v472 = vrot.slane %v460, 1
    %v473 = vrot.slane %v460, 2
    %v474 = vrot.slane %v460, 3
    %v475 = vrot.slane %v460, 4
    %v476 = vrot.slane %v460, 5
    %v477 = vrot.slane %v460, 6
    %v478 = vrot.slane %v460, 7
    %v495 = vmax.f32 %v314, %v458
    %v496 = vmax.f32 %v321, %v465
    %v497 = vmax.f32 %v328, %v466
    %v498 = vmax.f32 %v335, %v467
    %v499 = vmax.f32 %v342, %v468
    %v500 = vmax.f32 %v349, %v469
    %v501 = vmax.f32 %v356, %v470
    %v502 = vmax.f32 %v363, %v471
    %v503 = vmax.f32 %v370, %v460
    %v504 = vmax.f32 %v377, %v472
    %v505 = vmax.f32 %v384, %v473
    %v506 = vmax.f32 %v391, %v474
    %v507 = vmax.f32 %v398, %v475
    %v508 = vmax.f32 %v405, %v476
    %v509 = vmax.f32 %v412, %v477
    %v510 = vmax.f32 %v419, %v478
    %v527 = vrot.slane %v496, 7
    %v528 = vsel %vm436, %v527, %v495
    %v529 = vrot.slane %v497, 6
    %v530 = vsel %vm438, %v529, %v528
    %v531 = vrot.slane %v498, 5
    %v532 = vsel %vm440, %v531, %v530
    %v533 = vrot.slane %v499, 4
    %v534 = vsel %vm442, %v533, %v532
    %v535 = vrot.slane %v500, 3
    %v536 = vsel %vm444, %v535, %v534
    %v537 = vrot.slane %v501, 2
    %v538 = vsel %vm446, %v537, %v536
    %v539 = vrot.slane %v502, 1
    %v540 = vsel %vm448, %v539, %v538
    %v541 = vrot.slane %v504, 7
    %v542 = vsel %vm436, %v541, %v503
    %v543 = vrot.slane %v505, 6
    %v544 = vsel %vm438, %v543, %v542
    %v545 = vrot.slane %v506, 5
    %v546 = vsel %vm440, %v545, %v544
    %v547 = vrot.slane %v507, 4
    %v548 = vsel %vm442, %v547, %v546
    %v549 = vrot.slane %v508, 3
    %v550 = vsel %vm444, %v549, %v548
    %v551 = vrot.slane %v509, 2
    %v552 = vsel %vm446, %v551, %v550
    %v553 = vrot.slane %v510, 1
    %v554 = vsel %vm448, %v553, %v552
    %557 = vst [vmem:[#allocation3 + $0x1] sm:$0xff] %v540
    %558 = vst [vmem:[#allocation3 + $0x11] sm:$0xff] %v554
    %v559 = vld [vmem:[#allocation3] sm:$0xff]
    %v560 = vld [vmem:[#allocation3 + $0x10] sm:$0xff]
    %v561 = vld [vmem:[#allocation3 + $0x1] sm:$0xff]
    %v562 = vld [vmem:[#allocation3 + $0x11] sm:$0xff]
    %v563 = vld [vmem:[#allocation3 + $0x2] sm:$0xff]
    %v564 = vld [vmem:[#allocation3 + $0x12] sm:$0xff]
    %v565 = vld [vmem:[%s3] sm:$0xff]
    %v566 = vld [vmem:[%s3 + $0x8] sm:$0xff]
    %v567 = vld [vmem:[%s3 + $0x10] sm:$0xff]
    %v568 = vld [vmem:[%s3 + $0x18] sm:$0xff]
    %v569 = vld [vmem:[%s3 + $0x20] sm:$0xff]
    %v570 = vld [vmem:[%s3 + $0x28] sm:$0xff]
    %v571 = vld [vmem:[%s3 + $0x30] sm:$0xff]
    %v572 = vld [vmem:[%s3 + $0x38] sm:$0xff]
    %v573 = vld [vmem:[%s3 + $0x40] sm:$0xff]
    %v574 = vld [vmem:[%s3 + $0x48] sm:$0xff]
    %v575 = vld [vmem:[%s3 + $0x50] sm:$0xff]
    %v576 = vld [vmem:[%s3 + $0x58] sm:$0xff]
    %v577 = vld [vmem:[%s3 + $0x60] sm:$0xff]
    %v578 = vld [vmem:[%s3 + $0x68] sm:$0xff]
    %v579 = vld [vmem:[%s3 + $0x70] sm:$0xff]
    %v580 = vld [vmem:[%s3 + $0x78] sm:$0xff]
    %v581 = vld [vmem:[%s3 + $0x80] sm:$0xff]
    %v582 = vld [vmem:[%s3 + $0x88] sm:$0xff]
    %v583 = vld [vmem:[%s3 + $0x90] sm:$0xff]
    %v584 = vld [vmem:[%s3 + $0x98] sm:$0xff]
    %v585 = vld [vmem:[%s3 + $0xa0] sm:$0xff]
    %v586 = vld [vmem:[%s3 + $0xa8] sm:$0xff]
    %v587 = vld [vmem:[%s3 + $0xb0] sm:$0xff]
    %v588 = vld [vmem:[%s3 + $0xb8] sm:$0xff]
    %v589 = vld [vmem:[%s3 + $0xc0] sm:$0xff]
    %v590 = vld [vmem:[%s3 + $0xc8] sm:$0xff]
    %v591 = vld [vmem:[%s3 + $0xd0] sm:$0xff]
    %v592 = vld [vmem:[%s3 + $0xd8] sm:$0xff]
    %v593 = vld [vmem:[%s3 + $0xe0] sm:$0xff]
    %v594 = vld [vmem:[%s3 + $0xe8] sm:$0xff]
    %v595 = vld [vmem:[%s3 + $0xf0] sm:$0xff]
    %v596 = vld [vmem:[%s3 + $0xf8] sm:$0xff]
    %v597 = vld [vmem:[%s3 + $0x100] sm:$0xff]
    %v598 = vld [vmem:[%s3 + $0x108] sm:$0xff]
    %v599 = vld [vmem:[%s3 + $0x110] sm:$0xff]
    %v600 = vld [vmem:[%s3 + $0x118] sm:$0xff]
    %v601 = vld [vmem:[%s3 + $0x120] sm:$0xff]
    %v602 = vld [vmem:[%s3 + $0x128] sm:$0xff]
    %v603 = vld [vmem:[%s3 + $0x130] sm:$0xff]
    %v604 = vld [vmem:[%s3 + $0x138] sm:$0xff]
    %v605 = vld [vmem:[%s3 + $0x140] sm:$0xff]
    %v606 = vld [vmem:[%s3 + $0x148] sm:$0xff]
    %v607 = vld [vmem:[%s3 + $0x150] sm:$0xff]
    %v608 = vld [vmem:[%s3 + $0x158] sm:$0xff]
    %v609 = vld [vmem:[%s3 + $0x160] sm:$0xff]
    %v610 = vld [vmem:[%s3 + $0x168] sm:$0xff]
    %v611 = vld [vmem:[%s3 + $0x170] sm:$0xff]
    %v612 = vld [vmem:[%s3 + $0x178] sm:$0xff]
    %v613 = vld [vmem:[%s4] sm:$0x1]
    %v615 = vlaneseq
    %v616 = vshrl.u32 %v615, 7
    %v617 = vsub.s32 0, %v616
    %v618 = vrot.slane %v613, %v617
    %620 = vmatprep.subr.mxu0 0.0
    %621 = vmatpush1.msra.mxu0 %v565
    %622 = vmatprep.subr.mxu0 0.0
    %623 = vmatpush1.msra.mxu0 %v566
    %624 = vmatprep.subr.mxu0 0.0
    %625 = vmatpush1.msra.mxu0 %v567
    %626 = vmatprep.subr.mxu0 0.0
    %627 = vmatpush1.msra.mxu0 %v568
    %628 = vmatprep.subr.mxu0 0.0
    %629 = vmatpush1.msra.mxu0 %v569
    %630 = vmatprep.subr.mxu0 0.0
    %631 = vmatpush1.msra.mxu0 %v570
    %632 = vmatprep.subr.mxu0 0.0
    %633 = vmatpush1.msra.mxu0 %v571
    %634 = vmatprep.subr.mxu0 0.0
    %635 = vmatpush1.msra.mxu0 %v572
    %636 = vmatprep.subr.mxu0 0.0
    %637 = vmatpush1.msra.mxu0 %v573
    %638 = vmatprep.subr.mxu0 0.0
    %639 = vmatpush1.msra.mxu0 %v574
    %640 = vmatprep.subr.mxu0 0.0
    %641 = vmatpush1.msra.mxu0 %v575
    %642 = vmatprep.subr.mxu0 0.0
    %643 = vmatpush1.msra.mxu0 %v576
    %644 = vmatprep.subr.mxu0 0.0
    %645 = vmatpush1.msra.mxu0 %v577
    %646 = vmatprep.subr.mxu0 0.0
    %647 = vmatpush1.msra.mxu0 %v578
    %648 = vmatprep.subr.mxu0 0.0
    %649 = vmatpush1.msra.mxu0 %v579
    %650 = vmatprep.subr.mxu0 0.0
    %651 = vmatpush1.msra.mxu0 %v580
    %652 = vmatprep.subr.mxu0 0.0
    %653 = vmatpush1.msra.mxu0 %v581
    %654 = vmatprep.subr.mxu0 0.0
    %655 = vmatpush1.msra.mxu0 %v582
    %656 = vmatprep.subr.mxu0 0.0
    %657 = vmatpush1.msra.mxu0 %v583
    %658 = vmatprep.subr.mxu0 0.0
    %659 = vmatpush1.msra.mxu0 %v584
    %660 = vmatprep.subr.mxu0 0.0
    %661 = vmatpush1.msra.mxu0 %v585
    %662 = vmatprep.subr.mxu0 0.0
    %663 = vmatpush1.msra.mxu0 %v586
    %664 = vmatprep.subr.mxu0 0.0
    %665 = vmatpush1.msra.mxu0 %v587
    %666 = vmatprep.subr.mxu0 0.0
    %667 = vmatpush1.msra.mxu0 %v588
    %668 = vmatprep.subr.mxu0 0.0
    %669 = vmatpush1.msra.mxu0 %v589
    %670 = vmatprep.subr.mxu0 0.0
    %671 = vmatpush1.msra.mxu0 %v590
    %672 = vmatprep.subr.mxu0 0.0
    %673 = vmatpush1.msra.mxu0 %v591
    %674 = vmatprep.subr.mxu0 0.0
    %675 = vmatpush1.msra.mxu0 %v592
    %676 = vmatprep.subr.mxu0 0.0
    %677 = vmatpush1.msra.mxu0 %v593
    %678 = vmatprep.subr.mxu0 0.0
    %679 = vmatpush1.msra.mxu0 %v594
    %680 = vmatprep.subr.mxu0 0.0
    %681 = vmatpush1.msra.mxu0 %v595
    %682 = vmatprep.subr.mxu0 0.0
    %683 = vmatpush1.msra.mxu0 %v596
    %684 = vmatprep.mubr.f32.mxu0 %v561
    %685 = vmatmul.mubr.f32.gmra.mrb[0].mxu0 %v559
    %v686 = vpop.f32.mrb[0].mxu0
    %v687 = vadd.f32 %v618, %v686
    %v688 = vpop.f32.mrb[0].mxu0
    %689 = vmatprep.mubr.f32.mxu0 %v562
    %690 = vmatmul.mubr.f32.gmra.mrb[0].mxu0 %v560
    %v691 = vpop.f32.mrb[0].mxu0
    %v692 = vadd.f32 %v618, %v691
    %v693 = vpop.f32.mrb[0].mxu0
    %694 = vdwg.mxu0
    %695 = vmatprep.subr.mxu0 0.0
    %696 = vmatpush1.msra.mxu0 %v597
    %697 = vmatprep.subr.mxu0 0.0
    %698 = vmatpush1.msra.mxu0 %v598
    %699 = vmatprep.subr.mxu0 0.0
    %700 = vmatpush1.msra.mxu0 %v599
    %701 = vmatprep.subr.mxu0 0.0
    %702 = vmatpush1.msra.mxu0 %v600
    %703 = vmatprep.subr.mxu0 0.0
    %704 = vmatpush1.msra.mxu0 %v601
    %705 = vmatprep.subr.mxu0 0.0
    %706 = vmatpush1.msra.mxu0 %v602
    %707 = vmatprep.subr.mxu0 0.0
    %708 = vmatpush1.msra.mxu0 %v603
    %709 = vmatprep.subr.mxu0 0.0
    %710 = vmatpush1.msra.mxu0 %v604
    %711 = vmatprep.subr.mxu0 0.0
    %712 = vmatpush1.msra.mxu0 %v605
    %713 = vmatprep.subr.mxu0 0.0
    %714 = vmatpush1.msra.mxu0 %v606
    %715 = vmatprep.subr.mxu0 0.0
    %716 = vmatpush1.msra.mxu0 %v607
    %717 = vmatprep.subr.mxu0 0.0
    %718 = vmatpush1.msra.mxu0 %v608
    %719 = vmatprep.subr.mxu0 0.0
    %720 = vmatpush1.msra.mxu0 %v609
    %721 = vmatprep.subr.mxu0 0.0
    %722 = vmatpush1.msra.mxu0 %v610
    %723 = vmatprep.subr.mxu0 0.0
    %724 = vmatpush1.msra.mxu0 %v611
    %725 = vmatprep.subr.mxu0 0.0
    %726 = vmatpush1.msra.mxu0 %v612
    %727 = vmatprep.subr.mxu0 0.0
    %728 = vmatpush1.msra.mxu0 0.0
    %729 = vmatprep.subr.mxu0 0.0
    %730 = vmatpush1.msra.mxu0 0.0
    %731 = vmatprep.subr.mxu0 0.0
    %732 = vmatpush1.msra.mxu0 0.0
    %733 = vmatprep.subr.mxu0 0.0
    %734 = vmatpush1.msra.mxu0 0.0
    %735 = vmatprep.subr.mxu0 0.0
    %736 = vmatpush1.msra.mxu0 0.0
    %737 = vmatprep.subr.mxu0 0.0
    %738 = vmatpush1.msra.mxu0 0.0
    %739 = vmatprep.subr.mxu0 0.0
    %740 = vmatpush1.msra.mxu0 0.0
    %741 = vmatprep.subr.mxu0 0.0
    %742 = vmatpush1.msra.mxu0 0.0
    %743 = vmatprep.subr.mxu0 0.0
    %744 = vmatpush1.msra.mxu0 0.0
    %745 = vmatprep.subr.mxu0 0.0
    %746 = vmatpush1.msra.mxu0 0.0
    %747 = vmatprep.subr.mxu0 0.0
    %748 = vmatpush1.msra.mxu0 0.0
    %749 = vmatprep.subr.mxu0 0.0
    %750 = vmatpush1.msra.mxu0 0.0
    %751 = vmatprep.subr.mxu0 0.0
    %752 = vmatpush1.msra.mxu0 0.0
    %753 = vmatprep.subr.mxu0 0.0
    %754 = vmatpush1.msra.mxu0 0.0
    %755 = vmatprep.subr.mxu0 0.0
    %756 = vmatpush1.msra.mxu0 0.0
    %757 = vmatprep.subr.mxu0 0.0
    %758 = vmatpush1.msra.mxu0 0.0
    %759 = vmatprep.mubr.f32.mxu0 0.0
    %760 = vmatmul.mubr.f32.gmra.mrb[0].mxu0 %v563
    %v761 = vpop.f32.mrb[0].mxu0
    %v762 = vadd.f32 %v687, %v761
    %v763 = vpop.f32.mrb[0].mxu0
    %764 = vmatprep.mubr.f32.mxu0 0.0
    %765 = vmatmul.mubr.f32.gmra.mrb[0].mxu0 %v564
    %v766 = vpop.f32.mrb[0].mxu0
    %v767 = vadd.f32 %v692, %v766
    %v768 = vpop.f32.mrb[0].mxu0
    %769 = vdwg.mxu0
    %v770 = vmax.f32 %v762, 0.0
    %v771 = vmax.f32 %v767, 0.0
    %v774 = vcombine.high %v770, %v770
    %v776 = vunpack.c.l.s4 1983009808
    %v777 = vunpack.c.0.s8 %v776
    %v778 = vlaneseq
    %v779 = vshrl.u32 %v778, 7
    %v780 = vsub.s32 %v777, %v779
    %v781 = vrot.slane %v770, %v780
    %v783 = vunpack.c.l.s4 1983009808
    %v784 = vunpack.c.0.s8 %v783
    %v785 = vlaneseq
    %v786 = vshrl.u32 %v785, 7
    %v787 = vsub.s32 %v784, %v786
    %v788 = vrot.slane %v774, %v787
    %v789 = vcombine.high %v781, %v781
    %v790 = vcombine.high %v788, %v788
    %v791 = vcombine.high %v771, %v771
    %v793 = vunpack.c.l.s4 1983009808
    %v794 = vunpack.c.0.s8 %v793
    %v795 = vlaneseq
    %v796 = vshrl.u32 %v795, 7
    %v797 = vsub.s32 %v794, %v796
    %v798 = vrot.slane %v771, %v797
    %v800 = vunpack.c.l.s4 1983009808
    %v801 = vunpack.c.0.s8 %v800
    %v802 = vlaneseq
    %v803 = vshrl.u32 %v802, 7
    %v804 = vsub.s32 %v801, %v803
    %v805 = vrot.slane %v791, %v804
    %v806 = vcombine.high %v798, %v798
    %v807 = vcombine.high %v805, %v805
    %v816 = vsel %vm307, %v781, -inf
    %v817 = vrot.slane %v816, 4
    %v818 = vmax.f32 %v816, %v817
    %v819 = vrot.slane %v818, 2
    %v820 = vmax.f32 %v818, %v819
    %v821 = vrot.slane %v820, 1
    %v822 = vmax.f32 %v820, %v821
    %v823 = vsel %vm307, %v789, -inf
    %v824 = vrot.slane %v823, 4
    %v825 = vmax.f32 %v823, %v824
    %v826 = vrot.slane %v825, 2
    %v827 = vmax.f32 %v825, %v826
    %v828 = vrot.slane %v827, 1
    %v829 = vmax.f32 %v827, %v828
    %v830 = vsel %vm307, %v788, -inf
    %v831 = vrot.slane %v830, 4
    %v832 = vmax.f32 %v830, %v831
    %v833 = vrot.slane %v832, 2
    %v834 = vmax.f32 %v832, %v833
    %v835 = vrot.slane %v834, 1
    %v836 = vmax.f32 %v834, %v835
    %v837 = vsel %vm307, %v790, -inf
    %v838 = vrot.slane %v837, 4
    %v839 = vmax.f32 %v837, %v838
    %v840 = vrot.slane %v839, 2
    %v841 = vmax.f32 %v839, %v840
    %v842 = vrot.slane %v841, 1
    %v843 = vmax.f32 %v841, %v842
    %v844 = vsel %vm307, %v798, -inf
    %v845 = vrot.slane %v844, 4
    %v846 = vmax.f32 %v844, %v845
    %v847 = vrot.slane %v846, 2
    %v848 = vmax.f32 %v846, %v847
    %v849 = vrot.slane %v848, 1
    %v850 = vmax.f32 %v848, %v849
    %v851 = vsel %vm307, %v806, -inf
    %v852 = vrot.slane %v851, 4
    %v853 = vmax.f32 %v851, %v852
    %v854 = vrot.slane %v853, 2
    %v855 = vmax.f32 %v853, %v854
    %v856 = vrot.slane %v855, 1
    %v857 = vmax.f32 %v855, %v856
    %v858 = vsel %vm307, %v805, -inf
    %v859 = vrot.slane %v858, 4
    %v860 = vmax.f32 %v858, %v859
    %v861 = vrot.slane %v860, 2
    %v862 = vmax.f32 %v860, %v861
    %v863 = vrot.slane %v862, 1
    %v864 = vmax.f32 %v862, %v863
    %v865 = vsel %vm307, %v807, -inf
    %v866 = vrot.slane %v865, 4
    %v867 = vmax.f32 %v865, %v866
    %v868 = vrot.slane %v867, 2
    %v869 = vmax.f32 %v867, %v868
    %v870 = vrot.slane %v869, 1
    %v871 = vmax.f32 %v869, %v870
    %v880 = vsel %vm436, %v829, %v822
    %v881 = vsel %vm438, %v836, %v880
    %v882 = vsel %vm440, %v843, %v881
    %v883 = vsel %vm436, %v857, %v850
    %v884 = vsel %vm438, %v864, %v883
    %v885 = vsel %vm440, %v871, %v884
    %886 = vrot.lane.b32.xlu0 %v882, 112
    %v887 = vpop.permute.xlu0 %886
    %888 = vrot.lane.b32.xlu0 %v885, 112
    %v889 = vpop.permute.xlu0 %888
    %v894 = vrot.slane %v887, 1
    %v895 = vrot.slane %v887, 2
    %v896 = vrot.slane %v887, 3
    %v897 = vrot.slane %v889, 1
    %v898 = vrot.slane %v889, 2
    %v899 = vrot.slane %v889, 3
    %v908 = vmax.f32 %v822, %v887
    %v909 = vmax.f32 %v829, %v894
    %v910 = vmax.f32 %v836, %v895
    %v911 = vmax.f32 %v843, %v896
    %v912 = vmax.f32 %v850, %v889
    %v913 = vmax.f32 %v857, %v897
    %v914 = vmax.f32 %v864, %v898
    %v915 = vmax.f32 %v871, %v899
    %v918 = vrot.slane %v912, 7
    %v919 = vsel %vm436, %v918, %v908
    %v923 = vrot.slane %v913, 7
    %v924 = vsel %vm436, %v923, %v909
    %v928 = vrot.slane %v914, 7
    %v929 = vsel %vm436, %v928, %v910
    %v933 = vrot.slane %v915, 7
    %v934 = vsel %vm436, %v933, %v911
    %v936 = vld [vmem:[%s5] sm:$0xff]
    %v937 = vld [vmem:[%s5 + $0x8] sm:$0xff]
    %v938 = vld [vmem:[%s5 + $0x10] sm:$0xff]
    %v939 = vld [vmem:[%s5 + $0x18] sm:$0xff]
    %v940 = vld [vmem:[%s5 + $0x20] sm:$0xff]
    %v941 = vld [vmem:[%s5 + $0x28] sm:$0xff]
    %v942 = vld [vmem:[%s5 + $0x30] sm:$0xff]
    %v943 = vld [vmem:[%s5 + $0x38] sm:$0xff]
    %v944 = vld [vmem:[%s5 + $0x40] sm:$0xff]
    %v945 = vld [vmem:[%s5 + $0x48] sm:$0xff]
    %v946 = vld [vmem:[%s5 + $0x50] sm:$0xff]
    %v947 = vld [vmem:[%s5 + $0x58] sm:$0xff]
    %v948 = vld [vmem:[%s5 + $0x60] sm:$0xff]
    %v949 = vld [vmem:[%s5 + $0x68] sm:$0xff]
    %v950 = vld [vmem:[%s5 + $0x70] sm:$0xff]
    %v951 = vld [vmem:[%s5 + $0x78] sm:$0xff]
    %v952 = vld [vmem:[%s5 + $0x80] sm:$0xff]
    %v953 = vld [vmem:[%s5 + $0x88] sm:$0xff]
    %v954 = vld [vmem:[%s5 + $0x90] sm:$0xff]
    %v955 = vld [vmem:[%s5 + $0x98] sm:$0xff]
    %v956 = vld [vmem:[%s5 + $0xa0] sm:$0xff]
    %v957 = vld [vmem:[%s5 + $0xa8] sm:$0xff]
    %v958 = vld [vmem:[%s5 + $0xb0] sm:$0xff]
    %v959 = vld [vmem:[%s5 + $0xb8] sm:$0xff]
    %v960 = vld [vmem:[%s5 + $0xc0] sm:$0xff]
    %v961 = vld [vmem:[%s5 + $0xc8] sm:$0xff]
    %v962 = vld [vmem:[%s5 + $0xd0] sm:$0xff]
    %v963 = vld [vmem:[%s5 + $0xd8] sm:$0xff]
    %v964 = vld [vmem:[%s5 + $0xe0] sm:$0xff]
    %v965 = vld [vmem:[%s5 + $0xe8] sm:$0xff]
    %v966 = vld [vmem:[%s5 + $0xf0] sm:$0xff]
    %v967 = vld [vmem:[%s5 + $0xf8] sm:$0xff]
    %v968 = vld [vmem:[%s5 + $0x100] sm:$0xff]
    %v969 = vld [vmem:[%s5 + $0x108] sm:$0xff]
    %v970 = vld [vmem:[%s5 + $0x110] sm:$0xff]
    %v971 = vld [vmem:[%s5 + $0x118] sm:$0xff]
    %v972 = vld [vmem:[%s5 + $0x120] sm:$0xff]
    %v973 = vld [vmem:[%s5 + $0x128] sm:$0xff]
    %v974 = vld [vmem:[%s5 + $0x130] sm:$0xff]
    %v975 = vld [vmem:[%s5 + $0x138] sm:$0xff]
    %v976 = vld [vmem:[%s5 + $0x140] sm:$0xff]
    %v977 = vld [vmem:[%s5 + $0x148] sm:$0xff]
    %v978 = vld [vmem:[%s5 + $0x150] sm:$0xff]
    %v979 = vld [vmem:[%s5 + $0x158] sm:$0xff]
    %v980 = vld [vmem:[%s5 + $0x160] sm:$0xff]
    %v981 = vld [vmem:[%s5 + $0x168] sm:$0xff]
    %v982 = vld [vmem:[%s5 + $0x170] sm:$0xff]
    %v983 = vld [vmem:[%s5 + $0x178] sm:$0xff]
    %v984 = vld [vmem:[%s5 + $0x180] sm:$0xff]
    %v985 = vld [vmem:[%s5 + $0x188] sm:$0xff]
    %v986 = vld [vmem:[%s5 + $0x190] sm:$0xff]
    %v987 = vld [vmem:[%s5 + $0x198] sm:$0xff]
    %v988 = vld [vmem:[%s5 + $0x1a0] sm:$0xff]
    %v989 = vld [vmem:[%s5 + $0x1a8] sm:$0xff]
    %v990 = vld [vmem:[%s5 + $0x1b0] sm:$0xff]
    %v991 = vld [vmem:[%s5 + $0x1b8] sm:$0xff]
    %v992 = vld [vmem:[%s5 + $0x1c0] sm:$0xff]
    %v993 = vld [vmem:[%s5 + $0x1c8] sm:$0xff]
    %v994 = vld [vmem:[%s5 + $0x1d0] sm:$0xff]
    %v995 = vld [vmem:[%s5 + $0x1d8] sm:$0xff]
    %v996 = vld [vmem:[%s5 + $0x1e0] sm:$0xff]
    %v997 = vld [vmem:[%s5 + $0x1e8] sm:$0xff]
    %v998 = vld [vmem:[%s5 + $0x1f0] sm:$0xff]
    %v999 = vld [vmem:[%s5 + $0x1f8] sm:$0xff]
    %v1000 = vld [vmem:[%s6] sm:$0x1]
    %v1002 = vlaneseq
    %v1003 = vshrl.u32 %v1002, 7
    %v1004 = vsub.s32 0, %v1003
    %v1005 = vrot.slane %v1000, %v1004
    %1007 = vmatprep.subr.mxu0 0.0
    %1008 = vmatpush1.msra.mxu0 %v936
    %1009 = vmatprep.subr.mxu0 0.0
    %1010 = vmatpush1.msra.mxu0 %v937
    %1011 = vmatprep.subr.mxu0 0.0
    %1012 = vmatpush1.msra.mxu0 %v938
    %1013 = vmatprep.subr.mxu0 0.0
    %1014 = vmatpush1.msra.mxu0 %v939
    %1015 = vmatprep.subr.mxu0 0.0
    %1016 = vmatpush1.msra.mxu0 %v940
    %1017 = vmatprep.subr.mxu0 0.0
    %1018 = vmatpush1.msra.mxu0 %v941
    %1019 = vmatprep.subr.mxu0 0.0
    %1020 = vmatpush1.msra.mxu0 %v942
    %1021 = vmatprep.subr.mxu0 0.0
    %1022 = vmatpush1.msra.mxu0 %v943
    %1023 = vmatprep.subr.mxu0 0.0
    %1024 = vmatpush1.msra.mxu0 %v944
    %1025 = vmatprep.subr.mxu0 0.0
    %1026 = vmatpush1.msra.mxu0 %v945
    %1027 = vmatprep.subr.mxu0 0.0
    %1028 = vmatpush1.msra.mxu0 %v946
    %1029 = vmatprep.subr.mxu0 0.0
    %1030 = vmatpush1.msra.mxu0 %v947
    %1031 = vmatprep.subr.mxu0 0.0
    %1032 = vmatpush1.msra.mxu0 %v948
    %1033 = vmatprep.subr.mxu0 0.0
    %1034 = vmatpush1.msra.mxu0 %v949
    %1035 = vmatprep.subr.mxu0 0.0
    %1036 = vmatpush1.msra.mxu0 %v950
    %1037 = vmatprep.subr.mxu0 0.0
    %1038 = vmatpush1.msra.mxu0 %v951
    %1039 = vmatprep.subr.mxu0 0.0
    %1040 = vmatpush1.msra.mxu0 %v952
    %1041 = vmatprep.subr.mxu0 0.0
    %1042 = vmatpush1.msra.mxu0 %v953
    %1043 = vmatprep.subr.mxu0 0.0
    %1044 = vmatpush1.msra.mxu0 %v954
    %1045 = vmatprep.subr.mxu0 0.0
    %1046 = vmatpush1.msra.mxu0 %v955
    %1047 = vmatprep.subr.mxu0 0.0
    %1048 = vmatpush1.msra.mxu0 %v956
    %1049 = vmatprep.subr.mxu0 0.0
    %1050 = vmatpush1.msra.mxu0 %v957
    %1051 = vmatprep.subr.mxu0 0.0
    %1052 = vmatpush1.msra.mxu0 %v958
    %1053 = vmatprep.subr.mxu0 0.0
    %1054 = vmatpush1.msra.mxu0 %v959
    %1055 = vmatprep.subr.mxu0 0.0
    %1056 = vmatpush1.msra.mxu0 %v960
    %1057 = vmatprep.subr.mxu0 0.0
    %1058 = vmatpush1.msra.mxu0 %v961
    %1059 = vmatprep.subr.mxu0 0.0
    %1060 = vmatpush1.msra.mxu0 %v962
    %1061 = vmatprep.subr.mxu0 0.0
    %1062 = vmatpush1.msra.mxu0 %v963
    %1063 = vmatprep.subr.mxu0 0.0
    %1064 = vmatpush1.msra.mxu0 %v964
    %1065 = vmatprep.subr.mxu0 0.0
    %1066 = vmatpush1.msra.mxu0 %v965
    %1067 = vmatprep.subr.mxu0 0.0
    %1068 = vmatpush1.msra.mxu0 %v966
    %1069 = vmatprep.subr.mxu0 0.0
    %1070 = vmatpush1.msra.mxu0 %v967
    %1071 = vmatprep.mubr.f32.mxu0 %v924
    %1072 = vmatmul.mubr.f32.gmra.mrb[0].mxu0 %v919
    %v1073 = vpop.f32.mrb[0].mxu0
    %v1074 = vadd.f32 %v1005, %v1073
    %v1075 = vpop.f32.mrb[0].mxu0
    %1076 = vdwg.mxu0
    %1077 = vmatprep.subr.mxu0 0.0
    %1078 = vmatpush1.msra.mxu0 %v968
    %1079 = vmatprep.subr.mxu0 0.0
    %1080 = vmatpush1.msra.mxu0 %v969
    %1081 = vmatprep.subr.mxu0 0.0
    %1082 = vmatpush1.msra.mxu0 %v970
    %1083 = vmatprep.subr.mxu0 0.0
    %1084 = vmatpush1.msra.mxu0 %v971
    %1085 = vmatprep.subr.mxu0 0.0
    %1086 = vmatpush1.msra.mxu0 %v972
    %1087 = vmatprep.subr.mxu0 0.0
    %1088 = vmatpush1.msra.mxu0 %v973
    %1089 = vmatprep.subr.mxu0 0.0
    %1090 = vmatpush1.msra.mxu0 %v974
    %1091 = vmatprep.subr.mxu0 0.0
    %1092 = vmatpush1.msra.mxu0 %v975
    %1093 = vmatprep.subr.mxu0 0.0
    %1094 = vmatpush1.msra.mxu0 %v976
    %1095 = vmatprep.subr.mxu0 0.0
    %1096 = vmatpush1.msra.mxu0 %v977
    %1097 = vmatprep.subr.mxu0 0.0
    %1098 = vmatpush1.msra.mxu0 %v978
    %1099 = vmatprep.subr.mxu0 0.0
    %1100 = vmatpush1.msra.mxu0 %v979
    %1101 = vmatprep.subr.mxu0 0.0
    %1102 = vmatpush1.msra.mxu0 %v980
    %1103 = vmatprep.subr.mxu0 0.0
    %1104 = vmatpush1.msra.mxu0 %v981
    %1105 = vmatprep.subr.mxu0 0.0
    %1106 = vmatpush1.msra.mxu0 %v982
    %1107 = vmatprep.subr.mxu0 0.0
    %1108 = vmatpush1.msra.mxu0 %v983
    %1109 = vmatprep.subr.mxu0 0.0
    %1110 = vmatpush1.msra.mxu0 %v984
    %1111 = vmatprep.subr.mxu0 0.0
    %1112 = vmatpush1.msra.mxu0 %v985
    %1113 = vmatprep.subr.mxu0 0.0
    %1114 = vmatpush1.msra.mxu0 %v986
    %1115 = vmatprep.subr.mxu0 0.0
    %1116 = vmatpush1.msra.mxu0 %v987
    %1117 = vmatprep.subr.mxu0 0.0
    %1118 = vmatpush1.msra.mxu0 %v988
    %1119 = vmatprep.subr.mxu0 0.0
    %1120 = vmatpush1.msra.mxu0 %v989
    %1121 = vmatprep.subr.mxu0 0.0
    %1122 = vmatpush1.msra.mxu0 %v990
    %1123 = vmatprep.subr.mxu0 0.0
    %1124 = vmatpush1.msra.mxu0 %v991
    %1125 = vmatprep.subr.mxu0 0.0
    %1126 = vmatpush1.msra.mxu0 %v992
    %1127 = vmatprep.subr.mxu0 0.0
    %1128 = vmatpush1.msra.mxu0 %v993
    %1129 = vmatprep.subr.mxu0 0.0
    %1130 = vmatpush1.msra.mxu0 %v994
    %1131 = vmatprep.subr.mxu0 0.0
    %1132 = vmatpush1.msra.mxu0 %v995
    %1133 = vmatprep.subr.mxu0 0.0
    %1134 = vmatpush1.msra.mxu0 %v996
    %1135 = vmatprep.subr.mxu0 0.0
    %1136 = vmatpush1.msra.mxu0 %v997
    %1137 = vmatprep.subr.mxu0 0.0
    %1138 = vmatpush1.msra.mxu0 %v998
    %1139 = vmatprep.subr.mxu0 0.0
    %1140 = vmatpush1.msra.mxu0 %v999
    %1141 = vmatprep.mubr.f32.mxu0 %v934
    %1142 = vmatmul.mubr.f32.gmra.mrb[0].mxu0 %v929
    %v1143 = vpop.f32.mrb[0].mxu0
    %v1144 = vadd.f32 %v1074, %v1143
    %v1145 = vpop.f32.mrb[0].mxu0
    %1146 = vdwg.mxu0
    %v1147 = vmax.f32 %v1144, 0.0
    %v1148 = vld [vmem:[%s7] sm:$0xff]
    %v1149 = vld [vmem:[%s7 + $0x8] sm:$0xff]
    %v1150 = vld [vmem:[%s7 + $0x10] sm:$0xff]
    %v1151 = vld [vmem:[%s7 + $0x18] sm:$0xff]
    %v1152 = vld [vmem:[%s8] sm:$0x1]
    %v1154 = vlaneseq
    %v1155 = vshrl.u32 %v1154, 7
    %v1156 = vsub.s32 0, %v1155
    %v1157 = vrot.slane %v1152, %v1156
    %v1160 = vsel %vm99, %v1147, 0
    %1162 = vmatprep.subr.mxu0 0.0
    %1163 = vmatpush1.msra.mxu0 %v1148
    %1164 = vmatprep.subr.mxu0 0.0
    %1165 = vmatpush1.msra.mxu0 %v1149
    %1166 = vmatprep.subr.mxu0 0.0
    %1167 = vmatpush1.msra.mxu0 %v1150
    %1168 = vmatprep.subr.mxu0 0.0
    %1169 = vmatpush1.msra.mxu0 %v1151
    %1170 = vmatprep.subr.mxu0 0.0
    %1171 = vmatpush1.msra.mxu0 0.0
    %1172 = vmatprep.subr.mxu0 0.0
    %1173 = vmatpush1.msra.mxu0 0.0
    %1174 = vmatprep.subr.mxu0 0.0
    %1175 = vmatpush1.msra.mxu0 0.0
    %1176 = vmatprep.subr.mxu0 0.0
    %1177 = vmatpush1.msra.mxu0 0.0
    %1178 = vmatprep.subr.mxu0 0.0
    %1179 = vmatpush1.msra.mxu0 0.0
    %1180 = vmatprep.subr.mxu0 0.0
    %1181 = vmatpush1.msra.mxu0 0.0
    %1182 = vmatprep.subr.mxu0 0.0
    %1183 = vmatpush1.msra.mxu0 0.0
    %1184 = vmatprep.subr.mxu0 0.0
    %1185 = vmatpush1.msra.mxu0 0.0
    %1186 = vmatprep.subr.mxu0 0.0
    %1187 = vmatpush1.msra.mxu0 0.0
    %1188 = vmatprep.subr.mxu0 0.0
    %1189 = vmatpush1.msra.mxu0 0.0
    %1190 = vmatprep.subr.mxu0 0.0
    %1191 = vmatpush1.msra.mxu0 0.0
    %1192 = vmatprep.subr.mxu0 0.0
    %1193 = vmatpush1.msra.mxu0 0.0
    %1194 = vmatprep.subr.mxu0 0.0
    %1195 = vmatpush1.msra.mxu0 0.0
    %1196 = vmatprep.subr.mxu0 0.0
    %1197 = vmatpush1.msra.mxu0 0.0
    %1198 = vmatprep.subr.mxu0 0.0
    %1199 = vmatpush1.msra.mxu0 0.0
    %1200 = vmatprep.subr.mxu0 0.0
    %1201 = vmatpush1.msra.mxu0 0.0
    %1202 = vmatprep.subr.mxu0 0.0
    %1203 = vmatpush1.msra.mxu0 0.0
    %1204 = vmatprep.subr.mxu0 0.0
    %1205 = vmatpush1.msra.mxu0 0.0
    %1206 = vmatprep.subr.mxu0 0.0
    %1207 = vmatpush1.msra.mxu0 0.0
    %1208 = vmatprep.subr.mxu0 0.0
    %1209 = vmatpush1.msra.mxu0 0.0
    %1210 = vmatprep.subr.mxu0 0.0
    %1211 = vmatpush1.msra.mxu0 0.0
    %1212 = vmatprep.subr.mxu0 0.0
    %1213 = vmatpush1.msra.mxu0 0.0
    %1214 = vmatprep.subr.mxu0 0.0
    %1215 = vmatpush1.msra.mxu0 0.0
    %1216 = vmatprep.subr.mxu0 0.0
    %1217 = vmatpush1.msra.mxu0 0.0
    %1218 = vmatprep.subr.mxu0 0.0
    %1219 = vmatpush1.msra.mxu0 0.0
    %1220 = vmatprep.subr.mxu0 0.0
    %1221 = vmatpush1.msra.mxu0 0.0
    %1222 = vmatprep.subr.mxu0 0.0
    %1223 = vmatpush1.msra.mxu0 0.0
    %1224 = vmatprep.subr.mxu0 0.0
    %1225 = vmatpush1.msra.mxu0 0.0
    %1226 = vmatprep.mubr.f32.mxu0 0.0
    %1227 = vmatmul.mubr.f32.gmra.mrb[0].mxu0 %v1160
    %v1228 = vpop.f32.mrb[0].mxu0
    %v1229 = vadd.f32 %v1157, %v1228
    %v1230 = vpop.f32.mrb[0].mxu0
    %1231 = vdwg.mxu0
    %vm1232 = vcmask 9216
    %1233 = vst.msk [vmem:[#allocation4] sm:$0x3] %vm1232, %v1229
    // Predicated region
    $region38: #{cnn_only_forward.1} parent=1 // pred_check
      _
    $region39: #{cnn_only_forward.1} parent=1 // pred_check_branch
      %1235 = sbr.rel (0) target = $region41
    $region40: #{cnn_only_forward.1} parent=1 // pred_region
      %s1237 = ssub.s32 32, 32
      %1238 = vsyncadd [#allocation5], %s1237
      %s1240 = sshll.u32 [#allocation4], 4
      %s1241 = int_to_ptr.vmem [resolvable:$true] %s1240
      %1243 = dma.vmem_to_hbm [thread:$0]  %s1241, 32, %s9, [#allocation5]
    $region41: #{cnn_only_forward.1} parent=1 // pred_fallthru
      _
    // Predicated region
    $region42: #{cnn_only_forward.1} parent=1 // pred_check
      _
    $region43: #{cnn_only_forward.1} parent=1 // pred_check_branch
      %1245 = sbr.rel (0) target = $region45
    $region44: #{cnn_only_forward.1} parent=1 // pred_region
      %1246 = dma.done [#allocation5], 32
    $region45: #{cnn_only_forward.1} parent=1 // pred_fallthru
      _
    %1247 = vsyncpa [#allocation5], 1

</llo_original>
